<compile_context>
chip_gen: v6e
topology: v6e:2x2x1
jax: 0.10.0
libtpu: 0.0.40
codegen_flags: <defaults>
</compile_context>

<pallas_src>
import functools

import jax
import jax.numpy as jnp
from jax.experimental import pallas as pl
from jax.experimental.pallas import tpu as pltpu

_BN_EPS = 1e-5


def _round_up(x, m):
    return ((x + m - 1) // m) * m


def _choose_tiles(npts):
    """Padded per-cloud point count and per-layer row-tile sizes."""
    if npts <= 1024:
        n_pad = _round_up(npts, 8)              # one tile per cloud
        return n_pad, n_pad, n_pad
    # Padding granularity: big enough to amortize the ~0.35us/step grid cost,
    # small enough that point-padding waste stays low.
    base = 512 if npts >= 4096 else 256
    n_pad = _round_up(npts, base)
    # conv1/conv2 rows are cheap (<=128 channels): one whole padded cloud per
    # grid step (capped at 4096 rows) to kill per-step overhead.
    if n_pad <= 4096:
        pt12 = n_pad
    else:
        pt12 = next(c for c in (4096, 2048, 1024, 512, 256) if n_pad % c == 0)
    # conv3 materializes (pt, 1024) f32 temporaries in VMEM: cap at 1024 rows.
    pt3 = next(c for c in (1024, 512, 256) if n_pad % c == 0)
    return n_pad, pt12, pt3


# ---------------------------------------------------------------------------
# Pallas kernel: [prev-layer BN affine + ReLU] -> bf16 MXU matmul (f32 acc)
# -> this layer's BN statistics on the MXU (+ optionally the per-tile max/min
# for the fused global max pool, + optionally the bf16 activation store).
# Grid: (batch, point-tile), both axes fully "parallel" (all outputs are
# tile-indexed); tiles never cross point clouds.
# ---------------------------------------------------------------------------
def _layer_kernel(h_ref, scale_ref, shift_ref, w_ref, *out_refs,
                  pt, n_valid, n_pad, emit_out, emit_maxmin):
    refs = list(out_refs)
    out_ref = refs.pop(0) if emit_out else None
    sum_ref, sq_ref = refs[0], refs[1]
    max_ref, min_ref = (refs[2], refs[3]) if emit_maxmin else (None, None)

    has_pad = n_valid < n_pad
    use_mxu_stats = pt >= 128
    p = pl.program_id(1)

    # Previous layer's training-mode BatchNorm folded into a per-channel affine
    # (scale/shift precomputed in the wrapper from global sum/sumsq), then ReLU.
    a = h_ref[0].astype(jnp.float32) * scale_ref[...] + shift_ref[...]
    a = jnp.maximum(a, 0.0)

    # Kernel-size-1 Conv1d == matmul: bf16 on the MXU, f32 accumulation.
    # (Conv bias omitted: it cancels exactly under this layer's training BN.)
    h = jnp.dot(a.astype(jnp.bfloat16), w_ref[...],
                preferred_element_type=jnp.float32)             # (pt, Cout) f32

    if emit_out:
        out_ref[...] = h.astype(out_ref.dtype)[None]

    if has_pad:
        row_idx = p * pt + jax.lax.broadcasted_iota(jnp.int32, (pt, 1), 0)
        row_valid = row_idx < n_valid                           # (pt, 1) bool

    # --- BatchNorm statistics of THIS layer (reduced globally in the wrapper).
    if use_mxu_stats:
        # Row reductions on the (otherwise ~idle) MXU: sum = ones @ h.  The
        # point-padding mask is folded into the ones vector; 8 identical rows
        # keep the operand at the native sublane tile (row 0 is used).
        if has_pad:
            ones = ((p * pt + jax.lax.broadcasted_iota(jnp.int32, (8, pt), 1))
                    < n_valid).astype(jnp.bfloat16)
        else:
            ones = jnp.ones((8, pt), jnp.bfloat16)
        s = jnp.dot(ones, h.astype(jnp.bfloat16),
                    preferred_element_type=jnp.float32)[0:1]
        q = jnp.dot(ones, (h * h).astype(jnp.bfloat16),
                    preferred_element_type=jnp.float32)[0:1]
    else:
        hm = jnp.where(row_valid, h, 0.0) if has_pad else h
        s = jnp.sum(hm, axis=0, keepdims=True)
        q = jnp.sum(hm * hm, axis=0, keepdims=True)
    sum_ref[...] = s[None]
    sq_ref[...] = q[None]

    # --- fused global max pool: per-tile per-channel max/min of pre-BN h.
    # (min is needed because BN scale can be negative; padded rows are masked
    #  to -inf for the max and +inf for the min.)
    if emit_maxmin:
        if has_pad:
            hmx = jnp.where(row_valid, h, -jnp.inf)
            hmn = jnp.where(row_valid, h, jnp.inf)
        else:
            hmx = hmn = h
        max_ref[...] = jnp.max(hmx, axis=0, keepdims=True)[None]
        min_ref[...] = jnp.min(hmn, axis=0, keepdims=True)[None]


def _pallas_layer(h, scale, shift, w, *, pt, n_valid, emit_out, emit_maxmin):
    """One fused conv layer over (B, N_pad, Cin) activations.

    Returns (h_out or None, sum (1,Cout), sumsq (1,Cout)[, max (B,Cout), min (B,Cout)]).
    """
    bsz, n_pad, cin = h.shape
    cout = w.shape[1]
    n_tp = n_pad // pt
    n_st = bsz * n_tp                       # number of per-tile stat rows

    stat_spec = pl.BlockSpec((1, 1, cout), lambda b, p: (b * n_tp + p, 0, 0))
    stat_shape = jax.ShapeDtypeStruct((n_st, 1, cout), jnp.float32)

    in_specs = [
        pl.BlockSpec((1, pt, cin), lambda b, p: (b, p, 0)),     # activation tile
        pl.BlockSpec((1, cin), lambda b, p: (0, 0)),            # prev-BN scale
        pl.BlockSpec((1, cin), lambda b, p: (0, 0)),            # prev-BN shift
        pl.BlockSpec((cin, cout), lambda b, p: (0, 0)),         # weights (resident)
    ]
    out_specs, out_shape = [], []
    if emit_out:
        out_specs.append(pl.BlockSpec((1, pt, cout), lambda b, p: (b, p, 0)))
        out_shape.append(jax.ShapeDtypeStruct((bsz, n_pad, cout), jnp.bfloat16))
    out_specs += [stat_spec, stat_spec]
    out_shape += [stat_shape, stat_shape]
    if emit_maxmin:
        out_specs += [stat_spec, stat_spec]
        out_shape += [stat_shape, stat_shape]

    kernel = functools.partial(
        _layer_kernel, pt=pt, n_valid=n_valid, n_pad=n_pad,
        emit_out=emit_out, emit_maxmin=emit_maxmin)

    flops = 2 * bsz * n_pad * cin * cout + 4 * bsz * n_pad * cout
    bytes_accessed = (h.size * h.dtype.itemsize + 2 * cin * cout
                      + (2 * bsz * n_pad * cout if emit_out else 0)
                      + 4 * n_st * cout * (4 if emit_maxmin else 2))
    cost = pl.CostEstimate(flops=flops, transcendentals=0,
                           bytes_accessed=bytes_accessed)

    outs = pl.pallas_call(
        kernel,
        grid=(bsz, n_tp),
        in_specs=in_specs,
        out_specs=tuple(out_specs),
        out_shape=tuple(out_shape),
        compiler_params=pltpu.CompilerParams(
            dimension_semantics=("parallel", "parallel"),
            vmem_limit_bytes=32 * 1024 * 1024),
        cost_estimate=cost,
    )(h, scale, shift, w.astype(jnp.bfloat16))

    outs = list(outs)
    h_out = outs.pop(0) if emit_out else None
    s = jnp.sum(outs[0], axis=(0, 1))[None, :]
    q = jnp.sum(outs[1], axis=(0, 1))[None, :]
    if not emit_maxmin:
        return h_out, s, q
    mx = jnp.max(outs[2].reshape(bsz, n_tp, cout), axis=1)      # (B, Cout)
    mn = jnp.min(outs[3].reshape(bsz, n_tp, cout), axis=1)
    return h_out, s, q, mx, mn


# ---------------------------------------------------------------------------
# Wrapper glue (plain XLA where it belongs: conv1, BN-affine math, fc head).
# ---------------------------------------------------------------------------
def _bn_affine_from_stats(s, q, count, gamma, beta):
    """Per-channel affine (scale, shift) equal to training-mode BatchNorm1d
    (biased variance, eps=1e-5) computed from global sum / sum-of-squares."""
    count = jnp.float32(count)
    mean = s / count
    var = jnp.maximum(q / count - mean * mean, 0.0)
    scale = gamma * jax.lax.rsqrt(var + _BN_EPS)
    shift = beta - mean * scale
    return scale, shift


def _bn_relu_xla(h, gamma, beta):
    """Training-mode BatchNorm1d + ReLU (only for the tiny O(B)-row fc head)."""
    mean = jnp.mean(h, axis=0, keepdims=True)
    var = jnp.mean(jnp.square(h - mean), axis=0, keepdims=True)
    return jnp.maximum((h - mean) * jax.lax.rsqrt(var + _BN_EPS) * gamma + beta, 0.0)


def _conv_trunk(pts, p, *, final_relu):
    """Shared conv1->conv2->conv3 (+BN) trunk with fused global max pool.

    pts: (B, N, 3) f32 points-major input.  Returns (B, 1024) f32.
    final_relu=True  -> max over points of relu(bn3(conv3))   (STN3d trunk)
    final_relu=False -> max over points of bn3(conv3)         (PointNetfeat trunk)
    """
    bsz, npts, _ = pts.shape
    n_rows = bsz * npts
    n_pad, pt12, pt3 = _choose_tiles(npts)

    # Pad the points axis once; padded rows are masked out of every statistic
    # and out of the max/min.
    pts_pad = jnp.pad(pts, ((0, 0), (0, n_pad - npts), (0, 0)))

    # conv1 (3->64, K=1): lane-sparse Cin=3, negligible FLOPs -> plain XLA, off
    # the MXU.  Its f32 output feeds the conv2 kernel directly (no bf16 copy).
    # Conv biases are omitted everywhere: a pre-BN per-channel bias cancels
    # exactly under training-mode BatchNorm.
    h1 = jnp.einsum('bnc,ck->bnk', pts_pad, p['w1'])            # (B, n_pad, 64) f32
    if n_pad > npts:
        mask = (jnp.arange(n_pad) < npts).astype(h1.dtype)[None, :, None]
        h1m = h1 * mask
    else:
        h1m = h1
    s1 = jnp.sum(h1m, axis=(0, 1))[None, :]
    q1 = jnp.sum(h1m * h1, axis=(0, 1))[None, :]
    scale1, shift1 = _bn_affine_from_stats(s1, q1, n_rows, p['g1'], p['t1'])

    # conv2 (64->128): Pallas MXU kernel; fuses bn1+relu, emits bn2 stats,
    # writes bf16 h2 (whole padded cloud per grid step).
    h2, s2, q2 = _pallas_layer(h1, scale1, shift1, p['w2'],
                               pt=pt12, n_valid=npts,
                               emit_out=True, emit_maxmin=False)
    scale2, shift2 = _bn_affine_from_stats(s2, q2, n_rows, p['g2'], p['t2'])

    # conv3 (128->1024): Pallas MXU kernel; fuses bn2+relu, emits bn3 stats and
    # the per-tile max/min of the pre-BN activation -- h3 is never materialized.
    _, s3, q3, hmax, hmin = _pallas_layer(h2, scale2, shift2, p['w3'],
                                          pt=pt3, n_valid=npts,
                                          emit_out=False, emit_maxmin=True)
    scale3, shift3 = _bn_affine_from_stats(s3, q3, n_rows, p['g3'], p['t3'])

    # Global max over points of bn3(h3) (+ optional relu): BN is a per-channel
    # monotone affine, so the max comes from the pre-BN max (scale>=0) or the
    # pre-BN min (scale<0).
    g = jnp.where(scale3 >= 0.0, scale3 * hmax + shift3, scale3 * hmin + shift3)
    if final_relu:
        g = jnp.maximum(g, 0.0)
    return g                                                    # (B, 1024) f32


def _stn_fc_head(g, p):
    """STN3d fc head: (B,1024)->512->256->9 + flattened 3x3 identity.
    O(B) rows; plain XLA (a Pallas kernel here would force a 9-wide masked
    store and buys nothing)."""
    h = jnp.dot(g, p['w4']) + p['b4']
    h = _bn_relu_xla(h, p['g4'], p['t4'])
    h = jnp.dot(h, p['w5']) + p['b5']
    h = _bn_relu_xla(h, p['g5'], p['t5'])
    h = jnp.dot(h, p['w6']) + p['b6']                           # (B, 9)
    iden = jnp.eye(3, dtype=jnp.float32).reshape(1, 9)
    return (h + iden).reshape(-1, 3, 3)


def pointnetfeat_forward(x, stn_params, feat_params):
    """PointNetfeat forward (global_feat=True, feature_transform=False).

    x: (B, 3, N) f32 (PyTorch NCL layout).
    Returns (global_feature (B, 1024), trans (B, 3, 3), trans_feat=None).
    """
    bsz, c, npts = x.shape
    assert c == 3
    pts = jnp.transpose(x, (0, 2, 1))                           # (B, N, 3)

    # ---- STN3d: Pallas conv trunk + fused max pool, tiny fc head in XLA ----
    g = _conv_trunk(pts, stn_params, final_relu=True)           # (B, 1024)
    trans = _stn_fc_head(g, stn_params)                         # (B, 3, 3)

    # ---- apply the learned 3x3 input transform (tiny bmm; XLA) ----
    pts_t = jnp.einsum('bnc,bck->bnk', pts, trans)              # (B, N, 3)

    # ---- main feature trunk: conv1..3, bn3 WITHOUT relu, global max ----
    gfeat = _conv_trunk(pts_t, feat_params, final_relu=False)   # (B, 1024)

    # TODO(synk): global_feat=False (per-point concat) and feature_transform=True
    # (STNkd) branches are not implemented (module defaults are used).
    return gfeat, trans, None


# ---------------------------------------------------------------------------
# Deterministic synthetic parameters.  Conv weights stored (Cin, Cout) so the
# kernel does row-major x @ W; BN gamma=1, beta=0.  Conv biases are not created:
# they cancel exactly under training-mode BatchNorm (see perf note 4).
# ---------------------------------------------------------------------------
def _init_conv_bn(key, dims, start_idx):
    p = {}
    keys = jax.random.split(key, len(dims))
    for off, ((cin, cout), k) in enumerate(zip(dims, keys)):
        i = start_idx + off
        p[f'w{i}'] = (jax.random.normal(k, (cin, cout), jnp.float32)
                      / jnp.sqrt(jnp.float32(cin)))
        p[f'g{i}'] = jnp.ones((1, cout), jnp.float32)    # BN gamma
        p[f't{i}'] = jnp.zeros((1, cout), jnp.float32)   # BN beta
    return p


def init_feat_params(key):
    """Main PointNetfeat trunk: conv1/2/3 + bn1/2/3."""
    return _init_conv_bn(key, [(3, 64), (64, 128), (128, 1024)], 1)


def init_stn_params(key):
    """STN3d: conv trunk + fc head (fc1/fc2 with BN, fc3 without)."""
    k_trunk, k4, k5, k6 = jax.random.split(key, 4)
    p = _init_conv_bn(k_trunk, [(3, 64), (64, 128), (128, 1024)], 1)
    for i, (cin, cout), k in ((4, (1024, 512), k4), (5, (512, 256), k5)):
        p[f'w{i}'] = (jax.random.normal(k, (cin, cout), jnp.float32)
                      / jnp.sqrt(jnp.float32(cin)))
        p[f'b{i}'] = jnp.zeros((1, cout), jnp.float32)
        p[f'g{i}'] = jnp.ones((1, cout), jnp.float32)
        p[f't{i}'] = jnp.zeros((1, cout), jnp.float32)
    p['w6'] = (jax.random.normal(k6, (256, 9), jnp.float32)
               / jnp.sqrt(jnp.float32(256)))
    p['b6'] = jnp.zeros((1, 9), jnp.float32)
    return p


if __name__ == "__main__":
    key = jax.random.PRNGKey(0)
    kx, ks, kf = jax.random.split(key, 3)

    stn_params = init_stn_params(ks)
    feat_params = init_feat_params(kf)
    fwd = jax.jit(pointnetfeat_forward)

    # Primary small check: 2 clouds of 20 points (exercises point padding and
    # the tiny-tile VPU statistics fallback).
    B, N = 2, 20
    x = jax.random.normal(kx, (B, 3, N), jnp.float32)
    gfeat, trans, trans_feat = fwd(x, stn_params, feat_params)
    gfeat = jax.block_until_ready(gfeat)
    trans = jax.block_until_ready(trans)
    assert gfeat.shape == (B, 1024) and gfeat.dtype == jnp.float32
    assert trans.shape == (B, 3, 3) and trans.dtype == jnp.float32
    assert trans_feat is None
    assert bool(jnp.all(jnp.isfinite(gfeat))) and bool(jnp.all(jnp.isfinite(trans)))

    # Secondary check: 2 clouds of 250 points (exercises the MXU-side BN-stat
    # reductions, the >=128-row tiles, and the fused conv3 max/min with padding).
    B2, N2 = 2, 250
    x2 = jax.random.normal(kx, (B2, 3, N2), jnp.float32)
    gfeat2, trans2, _ = fwd(x2, stn_params, feat_params)
    gfeat2 = jax.block_until_ready(gfeat2)
    trans2 = jax.block_until_ready(trans2)
    assert gfeat2.shape == (B2, 1024) and gfeat2.dtype == jnp.float32
    assert bool(jnp.all(jnp.isfinite(gfeat2))) and bool(jnp.all(jnp.isfinite(trans2)))

    print("KERNEL_OK")
</pallas_src>

<mosaic_0001>
module attributes {stable_mosaic.version = 11 : i64} {
  func.func @_layer_kernel(%arg0: i32, %arg1: i32, %arg2: memref<1x24x64xf32, #tpu.memory_space<vmem>>, %arg3: memref<1x64xf32, #tpu.memory_space<vmem>>, %arg4: memref<1x64xf32, #tpu.memory_space<vmem>>, %arg5: memref<64x128xbf16, #tpu.memory_space<vmem>>, %arg6: memref<1x24x128xbf16, #tpu.memory_space<vmem>>, %arg7: memref<1x1x128xf32, #tpu.memory_space<vmem>>, %arg8: memref<1x1x128xf32, #tpu.memory_space<vmem>>) attributes {dimension_semantics = [#tpu.dimension_semantics<parallel>, #tpu.dimension_semantics<parallel>], iteration_bounds = array<i64: 2, 1>, scalar_prefetch = 0 : i64, scratch_operands = 0 : i64, tpu.core_type = #tpu.core_type<tc>, window_params = [{transform_indices = @transform_0, window_bounds = array<i64: 1, 24, 64>}, {pipeline_mode = #tpu.pipeline_mode<synchronous>, transform_indices = @transform_1, window_bounds = array<i64: 1, 64>}, {pipeline_mode = #tpu.pipeline_mode<synchronous>, transform_indices = @transform_2, window_bounds = array<i64: 1, 64>}, {pipeline_mode = #tpu.pipeline_mode<synchronous>, transform_indices = @transform_3, window_bounds = array<i64: 64, 128>}, {transform_indices = @transform_4, window_bounds = array<i64: 1, 24, 128>}, {transform_indices = @transform_5, window_bounds = array<i64: 1, 1, 128>}, {transform_indices = @transform_6, window_bounds = array<i64: 1, 1, 128>}]} {
    %c0 = arith.constant 0 : index
    %c0_0 = arith.constant 0 : index
    %c0_1 = arith.constant 0 : index
    %0 = vector.load %arg2[%c0, %c0_0, %c0_1] : memref<1x24x64xf32, #tpu.memory_space<vmem>>, vector<1x24x64xf32>
    %1 = vector.shape_cast %0 : vector<1x24x64xf32> to vector<24x64xf32>
    %c0_2 = arith.constant 0 : index
    %c0_3 = arith.constant 0 : index
    %2 = vector.load %arg3[%c0_2, %c0_3] : memref<1x64xf32, #tpu.memory_space<vmem>>, vector<1x64xf32>
    %3 = vector.broadcast %2 : vector<1x64xf32> to vector<24x64xf32>
    %4 = arith.mulf %1, %3 : vector<24x64xf32>
    %c0_4 = arith.constant 0 : index
    %c0_5 = arith.constant 0 : index
    %5 = vector.load %arg4[%c0_4, %c0_5] : memref<1x64xf32, #tpu.memory_space<vmem>>, vector<1x64xf32>
    %6 = vector.broadcast %5 : vector<1x64xf32> to vector<24x64xf32>
    %7 = arith.addf %4, %6 : vector<24x64xf32>
    %cst = arith.constant 0.000000e+00 : f32
    %8 = vector.broadcast %cst : f32 to vector<24x64xf32>
    %9 = arith.maximumf %7, %8 : vector<24x64xf32>
    %10 = arith.truncf %9 : vector<24x64xf32> to vector<24x64xbf16>
    %c0_6 = arith.constant 0 : index
    %c0_7 = arith.constant 0 : index
    %11 = vector.load %arg5[%c0_6, %c0_7] : memref<64x128xbf16, #tpu.memory_space<vmem>>, vector<64x128xbf16>
    %cst_8 = arith.constant dense<0.000000e+00> : vector<24x128xf32>
    %12 = tpu.matmul %10, %11, %cst_8 {dimension_numbers = #tpu.dot_dimension_numbers<[1], [0], [0], [1], [0, 0, 1, 1], [], []>} : vector<24x64xbf16>, vector<64x128xbf16>, vector<24x128xf32> -> vector<24x128xf32>
    %13 = arith.truncf %12 : vector<24x128xf32> to vector<24x128xbf16>
    %14 = vector.shape_cast %13 : vector<24x128xbf16> to vector<1x24x128xbf16>
    %c0_9 = arith.constant 0 : index
    %c0_10 = arith.constant 0 : index
    %c0_11 = arith.constant 0 : index
    %15 = vector.load %arg6[%c0_9, %c0_10, %c0_11] : memref<1x24x128xbf16, #tpu.memory_space<vmem>>, vector<1x24x128xbf16>
    tpu.vector_store %arg6[%c0_9, %c0_10, %c0_11], %14 {strides = array<i32>} : memref<1x24x128xbf16, #tpu.memory_space<vmem>>, vector<1x24x128xbf16>,
    %c24_i32 = arith.constant 24 : i32
    %16 = arith.muli %arg1, %c24_i32 : i32
    %17 = tpu.iota {dimensions = array<i32: 0>} : vector<24x1xi32>
    %18 = vector.broadcast %16 : i32 to vector<24x1xi32>
    %19 = arith.addi %18, %17 : vector<24x1xi32>
    %c20_i32 = arith.constant 20 : i32
    %20 = vector.broadcast %c20_i32 : i32 to vector<24x1xi32>
    %21 = arith.cmpi slt, %19, %20 : vector<24x1xi32>
    %cst_12 = arith.constant 0.000000e+00 : f32
    %22 = vector.shape_cast %21 : vector<24x1xi1> to vector<24x1xi1>
    %23 = vector.broadcast %22 : vector<24x1xi1> to vector<24x128xi1>
    %24 = vector.broadcast %cst_12 : f32 to vector<24x128xf32>
    %25 = arith.select %23, %12, %24 : vector<24x128xi1>, vector<24x128xf32>
    %cst_13 = arith.constant dense<0.000000e+00> : vector<128xf32>
    %26 = vector.multi_reduction <add>, %25, %cst_13 [0] : vector<24x128xf32> to vector<128xf32>
    %27 = vector.shape_cast %26 : vector<128xf32> to vector<1x128xf32>
    %28 = arith.mulf %25, %25 : vector<24x128xf32>
    %cst_14 = arith.constant dense<0.000000e+00> : vector<128xf32>
    %29 = vector.multi_reduction <add>, %28, %cst_14 [0] : vector<24x128xf32> to vector<128xf32>
    %30 = vector.shape_cast %29 : vector<128xf32> to vector<1x128xf32>
    %31 = vector.shape_cast %27 : vector<1x128xf32> to vector<1x1x128xf32>
    %c0_15 = arith.constant 0 : index
    %c0_16 = arith.constant 0 : index
    %c0_17 = arith.constant 0 : index
    %32 = vector.load %arg7[%c0_15, %c0_16, %c0_17] : memref<1x1x128xf32, #tpu.memory_space<vmem>>, vector<1x1x128xf32>
    tpu.vector_store %arg7[%c0_15, %c0_16, %c0_17], %31 {strides = array<i32>} : memref<1x1x128xf32, #tpu.memory_space<vmem>>, vector<1x1x128xf32>,
    %33 = vector.shape_cast %30 : vector<1x128xf32> to vector<1x1x128xf32>
    %c0_18 = arith.constant 0 : index
    %c0_19 = arith.constant 0 : index
    %c0_20 = arith.constant 0 : index
    %34 = vector.load %arg8[%c0_18, %c0_19, %c0_20] : memref<1x1x128xf32, #tpu.memory_space<vmem>>, vector<1x1x128xf32>
    tpu.vector_store %arg8[%c0_18, %c0_19, %c0_20], %33 {strides = array<i32>} : memref<1x1x128xf32, #tpu.memory_space<vmem>>, vector<1x1x128xf32>,
    return
  }
  func.func @transform_0(%arg0: i32, %arg1: i32) -> (i32, i32, i32) {
    %c0_i32 = arith.constant 0 : i32
    %c0_i32_0 = arith.constant 0 : i32
    return %arg0, %arg1, %c0_i32 : i32, i32, i32
  }
  func.func @transform_1(%arg0: i32, %arg1: i32) -> (i32, i32) {
    %c0_i32 = arith.constant 0 : i32
    %c0_i32_0 = arith.constant 0 : i32
    %c0_i32_1 = arith.constant 0 : i32
    return %c0_i32, %c0_i32_0 : i32, i32
  }
  func.func @transform_2(%arg0: i32, %arg1: i32) -> (i32, i32) {
    %c0_i32 = arith.constant 0 : i32
    %c0_i32_0 = arith.constant 0 : i32
    %c0_i32_1 = arith.constant 0 : i32
    return %c0_i32, %c0_i32_0 : i32, i32
  }
  func.func @transform_3(%arg0: i32, %arg1: i32) -> (i32, i32) {
    %c0_i32 = arith.constant 0 : i32
    %c0_i32_0 = arith.constant 0 : i32
    %c0_i32_1 = arith.constant 0 : i32
    return %c0_i32, %c0_i32_0 : i32, i32
  }
  func.func @transform_4(%arg0: i32, %arg1: i32) -> (i32, i32, i32) {
    %c0_i32 = arith.constant 0 : i32
    %c0_i32_0 = arith.constant 0 : i32
    return %arg0, %arg1, %c0_i32 : i32, i32, i32
  }
  func.func @transform_5(%arg0: i32, %arg1: i32) -> (i32, i32, i32) {
    %c1_i32 = arith.constant 1 : i32
    %0 = arith.muli %arg0, %c1_i32 : i32
    %1 = arith.addi %0, %arg1 : i32
    %c0_i32 = arith.constant 0 : i32
    %c0_i32_0 = arith.constant 0 : i32
    %c0_i32_1 = arith.constant 0 : i32
    return %1, %c0_i32, %c0_i32_0 : i32, i32, i32
  }
  func.func @transform_6(%arg0: i32, %arg1: i32) -> (i32, i32, i32) {
    %c1_i32 = arith.constant 1 : i32
    %0 = arith.muli %arg0, %c1_i32 : i32
    %1 = arith.addi %0, %arg1 : i32
    %c0_i32 = arith.constant 0 : i32
    %c0_i32_0 = arith.constant 0 : i32
    %c0_i32_1 = arith.constant 0 : i32
    return %1, %c0_i32, %c0_i32_0 : i32, i32, i32
  }
}

module attributes {stable_mosaic.version = 11 : i64} {
  func.func @_layer_kernel(%arg0: i32, %arg1: i32, %arg2: memref<1x24x128xbf16, #tpu.memory_space<vmem>>, %arg3: memref<1x128xf32, #tpu.memory_space<vmem>>, %arg4: memref<1x128xf32, #tpu.memory_space<vmem>>, %arg5: memref<128x1024xbf16, #tpu.memory_space<vmem>>, %arg6: memref<1x1x1024xf32, #tpu.memory_space<vmem>>, %arg7: memref<1x1x1024xf32, #tpu.memory_space<vmem>>, %arg8: memref<1x1x1024xf32, #tpu.memory_space<vmem>>, %arg9: memref<1x1x1024xf32, #tpu.memory_space<vmem>>) attributes {dimension_semantics = [#tpu.dimension_semantics<parallel>, #tpu.dimension_semantics<parallel>], iteration_bounds = array<i64: 2, 1>, scalar_prefetch = 0 : i64, scratch_operands = 0 : i64, tpu.core_type = #tpu.core_type<tc>, window_params = [{transform_indices = @transform_0, window_bounds = array<i64: 1, 24, 128>}, {pipeline_mode = #tpu.pipeline_mode<synchronous>, transform_indices = @transform_1, window_bounds = array<i64: 1, 128>}, {pipeline_mode = #tpu.pipeline_mode<synchronous>, transform_indices = @transform_2, window_bounds = array<i64: 1, 128>}, {pipeline_mode = #tpu.pipeline_mode<synchronous>, transform_indices = @transform_3, window_bounds = array<i64: 128, 1024>}, {transform_indices = @transform_4, window_bounds = array<i64: 1, 1, 1024>}, {transform_indices = @transform_5, window_bounds = array<i64: 1, 1, 1024>}, {transform_indices = @transform_6, window_bounds = array<i64: 1, 1, 1024>}, {transform_indices = @transform_7, window_bounds = array<i64: 1, 1, 1024>}]} {
    %c0 = arith.constant 0 : index
    %c0_0 = arith.constant 0 : index
    %c0_1 = arith.constant 0 : index
    %0 = vector.load %arg2[%c0, %c0_0, %c0_1] : memref<1x24x128xbf16, #tpu.memory_space<vmem>>, vector<1x24x128xbf16>
    %1 = vector.shape_cast %0 : vector<1x24x128xbf16> to vector<24x128xbf16>
    %2 = arith.extf %1 : vector<24x128xbf16> to vector<24x128xf32>
    %c0_2 = arith.constant 0 : index
    %c0_3 = arith.constant 0 : index
    %3 = vector.load %arg3[%c0_2, %c0_3] : memref<1x128xf32, #tpu.memory_space<vmem>>, vector<1x128xf32>
    %4 = vector.broadcast %3 : vector<1x128xf32> to vector<24x128xf32>
    %5 = arith.mulf %2, %4 : vector<24x128xf32>
    %c0_4 = arith.constant 0 : index
    %c0_5 = arith.constant 0 : index
    %6 = vector.load %arg4[%c0_4, %c0_5] : memref<1x128xf32, #tpu.memory_space<vmem>>, vector<1x128xf32>
    %7 = vector.broadcast %6 : vector<1x128xf32> to vector<24x128xf32>
    %8 = arith.addf %5, %7 : vector<24x128xf32>
    %cst = arith.constant 0.000000e+00 : f32
    %9 = vector.broadcast %cst : f32 to vector<24x128xf32>
    %10 = arith.maximumf %8, %9 : vector<24x128xf32>
    %11 = arith.truncf %10 : vector<24x128xf32> to vector<24x128xbf16>
    %c0_6 = arith.constant 0 : index
    %c0_7 = arith.constant 0 : index
    %12 = vector.load %arg5[%c0_6, %c0_7] : memref<128x1024xbf16, #tpu.memory_space<vmem>>, vector<128x1024xbf16>
    %cst_8 = arith.constant dense<0.000000e+00> : vector<24x1024xf32>
    %13 = tpu.matmul %11, %12, %cst_8 {dimension_numbers = #tpu.dot_dimension_numbers<[1], [0], [0], [1], [0, 0, 1, 1], [], []>} : vector<24x128xbf16>, vector<128x1024xbf16>, vector<24x1024xf32> -> vector<24x1024xf32>
    %c24_i32 = arith.constant 24 : i32
    %14 = arith.muli %arg1, %c24_i32 : i32
    %15 = tpu.iota {dimensions = array<i32: 0>} : vector<24x1xi32>
    %16 = vector.broadcast %14 : i32 to vector<24x1xi32>
    %17 = arith.addi %16, %15 : vector<24x1xi32>
    %c20_i32 = arith.constant 20 : i32
    %18 = vector.broadcast %c20_i32 : i32 to vector<24x1xi32>
    %19 = arith.cmpi slt, %17, %18 : vector<24x1xi32>
    %cst_9 = arith.constant 0.000000e+00 : f32
    %20 = vector.shape_cast %19 : vector<24x1xi1> to vector<24x1xi1>
    %21 = vector.broadcast %20 : vector<24x1xi1> to vector<24x1024xi1>
    %22 = vector.broadcast %cst_9 : f32 to vector<24x1024xf32>
    %23 = arith.select %21, %13, %22 : vector<24x1024xi1>, vector<24x1024xf32>
    %cst_10 = arith.constant dense<0.000000e+00> : vector<1024xf32>
    %24 = vector.multi_reduction <add>, %23, %cst_10 [0] : vector<24x1024xf32> to vector<1024xf32>
    %25 = vector.shape_cast %24 : vector<1024xf32> to vector<1x1024xf32>
    %26 = arith.mulf %23, %23 : vector<24x1024xf32>
    %cst_11 = arith.constant dense<0.000000e+00> : vector<1024xf32>
    %27 = vector.multi_reduction <add>, %26, %cst_11 [0] : vector<24x1024xf32> to vector<1024xf32>
    %28 = vector.shape_cast %27 : vector<1024xf32> to vector<1x1024xf32>
    %29 = vector.shape_cast %25 : vector<1x1024xf32> to vector<1x1x1024xf32>
    %c0_12 = arith.constant 0 : index
    %c0_13 = arith.constant 0 : index
    %c0_14 = arith.constant 0 : index
    %30 = vector.load %arg6[%c0_12, %c0_13, %c0_14] : memref<1x1x1024xf32, #tpu.memory_space<vmem>>, vector<1x1x1024xf32>
    tpu.vector_store %arg6[%c0_12, %c0_13, %c0_14], %29 {strides = array<i32>} : memref<1x1x1024xf32, #tpu.memory_space<vmem>>, vector<1x1x1024xf32>,
    %31 = vector.shape_cast %28 : vector<1x1024xf32> to vector<1x1x1024xf32>
    %c0_15 = arith.constant 0 : index
    %c0_16 = arith.constant 0 : index
    %c0_17 = arith.constant 0 : index
    %32 = vector.load %arg7[%c0_15, %c0_16, %c0_17] : memref<1x1x1024xf32, #tpu.memory_space<vmem>>, vector<1x1x1024xf32>
    tpu.vector_store %arg7[%c0_15, %c0_16, %c0_17], %31 {strides = array<i32>} : memref<1x1x1024xf32, #tpu.memory_space<vmem>>, vector<1x1x1024xf32>,
    %cst_18 = arith.constant 0xFF800000 : f32
    %33 = vector.shape_cast %19 : vector<24x1xi1> to vector<24x1xi1>
    %34 = vector.broadcast %33 : vector<24x1xi1> to vector<24x1024xi1>
    %35 = vector.broadcast %cst_18 : f32 to vector<24x1024xf32>
    %36 = arith.select %34, %13, %35 : vector<24x1024xi1>, vector<24x1024xf32>
    %cst_19 = arith.constant 0x7F800000 : f32
    %37 = vector.shape_cast %19 : vector<24x1xi1> to vector<24x1xi1>
    %38 = vector.broadcast %37 : vector<24x1xi1> to vector<24x1024xi1>
    %39 = vector.broadcast %cst_19 : f32 to vector<24x1024xf32>
    %40 = arith.select %38, %13, %39 : vector<24x1024xi1>, vector<24x1024xf32>
    %cst_20 = arith.constant dense<0xFF800000> : vector<1024xf32>
    %41 = vector.multi_reduction <maximumf>, %36, %cst_20 [0] : vector<24x1024xf32> to vector<1024xf32>
    %42 = vector.shape_cast %41 : vector<1024xf32> to vector<1x1024xf32>
    %43 = vector.shape_cast %42 : vector<1x1024xf32> to vector<1x1x1024xf32>
    %c0_21 = arith.constant 0 : index
    %c0_22 = arith.constant 0 : index
    %c0_23 = arith.constant 0 : index
    %44 = vector.load %arg8[%c0_21, %c0_22, %c0_23] : memref<1x1x1024xf32, #tpu.memory_space<vmem>>, vector<1x1x1024xf32>
    tpu.vector_store %arg8[%c0_21, %c0_22, %c0_23], %43 {strides = array<i32>} : memref<1x1x1024xf32, #tpu.memory_space<vmem>>, vector<1x1x1024xf32>,
    %cst_24 = arith.constant dense<0x7F800000> : vector<1024xf32>
    %45 = vector.multi_reduction <minimumf>, %40, %cst_24 [0] : vector<24x1024xf32> to vector<1024xf32>
    %46 = vector.shape_cast %45 : vector<1024xf32> to vector<1x1024xf32>
    %47 = vector.shape_cast %46 : vector<1x1024xf32> to vector<1x1x1024xf32>
    %c0_25 = arith.constant 0 : index
    %c0_26 = arith.constant 0 : index
    %c0_27 = arith.constant 0 : index
    %48 = vector.load %arg9[%c0_25, %c0_26, %c0_27] : memref<1x1x1024xf32, #tpu.memory_space<vmem>>, vector<1x1x1024xf32>
    tpu.vector_store %arg9[%c0_25, %c0_26, %c0_27], %47 {strides = array<i32>} : memref<1x1x1024xf32, #tpu.memory_space<vmem>>, vector<1x1x1024xf32>,
    return
  }
  func.func @transform_0(%arg0: i32, %arg1: i32) -> (i32, i32, i32) {
    %c0_i32 = arith.constant 0 : i32
    %c0_i32_0 = arith.constant 0 : i32
    return %arg0, %arg1, %c0_i32 : i32, i32, i32
  }
  func.func @transform_1(%arg0: i32, %arg1: i32) -> (i32, i32) {
    %c0_i32 = arith.constant 0 : i32
    %c0_i32_0 = arith.constant 0 : i32
    %c0_i32_1 = arith.constant 0 : i32
    return %c0_i32, %c0_i32_0 : i32, i32
  }
  func.func @transform_2(%arg0: i32, %arg1: i32) -> (i32, i32) {
    %c0_i32 = arith.constant 0 : i32
    %c0_i32_0 = arith.constant 0 : i32
    %c0_i32_1 = arith.constant 0 : i32
    return %c0_i32, %c0_i32_0 : i32, i32
  }
  func.func @transform_3(%arg0: i32, %arg1: i32) -> (i32, i32) {
    %c0_i32 = arith.constant 0 : i32
    %c0_i32_0 = arith.constant 0 : i32
    %c0_i32_1 = arith.constant 0 : i32
    return %c0_i32, %c0_i32_0 : i32, i32
  }
  func.func @transform_4(%arg0: i32, %arg1: i32) -> (i32, i32, i32) {
    %c1_i32 = arith.constant 1 : i32
    %0 = arith.muli %arg0, %c1_i32 : i32
    %1 = arith.addi %0, %arg1 : i32
    %c0_i32 = arith.constant 0 : i32
    %c0_i32_0 = arith.constant 0 : i32
    %c0_i32_1 = arith.constant 0 : i32
    return %1, %c0_i32, %c0_i32_0 : i32, i32, i32
  }
  func.func @transform_5(%arg0: i32, %arg1: i32) -> (i32, i32, i32) {
    %c1_i32 = arith.constant 1 : i32
    %0 = arith.muli %arg0, %c1_i32 : i32
    %1 = arith.addi %0, %arg1 : i32
    %c0_i32 = arith.constant 0 : i32
    %c0_i32_0 = arith.constant 0 : i32
    %c0_i32_1 = arith.constant 0 : i32
    return %1, %c0_i32, %c0_i32_0 : i32, i32, i32
  }
  func.func @transform_6(%arg0: i32, %arg1: i32) -> (i32, i32, i32) {
    %c1_i32 = arith.constant 1 : i32
    %0 = arith.muli %arg0, %c1_i32 : i32
    %1 = arith.addi %0, %arg1 : i32
    %c0_i32 = arith.constant 0 : i32
    %c0_i32_0 = arith.constant 0 : i32
    %c0_i32_1 = arith.constant 0 : i32
    return %1, %c0_i32, %c0_i32_0 : i32, i32, i32
  }
  func.func @transform_7(%arg0: i32, %arg1: i32) -> (i32, i32, i32) {
    %c1_i32 = arith.constant 1 : i32
    %0 = arith.muli %arg0, %c1_i32 : i32
    %1 = arith.addi %0, %arg1 : i32
    %c0_i32 = arith.constant 0 : i32
    %c0_i32_0 = arith.constant 0 : i32
    %c0_i32_1 = arith.constant 0 : i32
    return %1, %c0_i32, %c0_i32_0 : i32, i32, i32
  }
}

</mosaic_0001>

<llo_original>
// kernel: pointnetfeat_forward.4
$region0: #{pointnetfeat_forward.4}
  #allocation0 [shape = 'u32[]', space=smem, size = 0x4, offset = 0x4, fixed_abs, tag = 'smem constant byte address 0x4 - core index']
  #allocation1 [shape = 'u32[144,128]{1,0:T(1,128)}', space=vmem, size = 0x12000, scoped, tag = 'internal scratch']
  %s0 = inlined_call_operand.vmem [shape: f32[2,24,64], index: 0, kind: input, shape index: {}]
  %s1 = inlined_call_operand.vmem [shape: f32[1,64], index: 1, kind: input, shape index: {}]
  %s2 = inlined_call_operand.vmem [shape: f32[1,64], index: 2, kind: input, shape index: {}]
  %s3 = inlined_call_operand.vmem [shape: bf16[64,128], index: 3, kind: input, shape index: {}]
  %s4 = inlined_call_operand.vmem [shape: bf16[2,24,128], index: 4, kind: output, shape index: {0}]
  %s5 = inlined_call_operand.vmem [shape: f32[2,1,128], index: 5, kind: output, shape index: {1}]
  %s6 = inlined_call_operand.vmem [shape: f32[2,1,128], index: 6, kind: output, shape index: {2}]
  %7 = xla_tuple %s4, %s5, %s6
  %s8 = sld [smem:[#allocation0]]
  $region65: #{pointnetfeat_forward.4} parent=0
    _
  %s10 = ssub.s32 1, %s8
  %s11 = scalar_select 0, %s10, %s8
  loop: start=0, step=1, limit=4
  $region2: #{pointnetfeat_forward.4} parent=0 // loop_pre_header
    _
  $region3: #{pointnetfeat_forward.4} parent=0 // loop_header
    %s13 = sphi 0, %s17
    %p14 = scmp.ge.s32.totalorder %s13, 4
    %s20 = sphi 0, %s32
    %s21 = sphi 0, %s28
    %s22 = sphi 0, %s20
    %s23 = sphi 0, %s21
    %s24 = sphi 0, %s22
    %s25 = sphi 0, %s23
    %s37 = sphi 0, %s39
    %s40 = sphi 0, %s37
    %s41 = sphi 0, %s40
    %s57 = sphi 0, %s41
    %s61 = sphi 0, %s61
    %s63 = sphi 0, %s61
    %s64 = sphi 0, %s63
    %s78 = sphi 0, %s64
    %s82 = sphi 0, %s82
    %s84 = sphi 0, %s82
    %s85 = sphi 0, %s84
    %s99 = sphi 0, %s85
    %s103 = sphi 0, %s103
    %s105 = sphi 0, %s103
    %s106 = sphi 0, %s105
    %s120 = sphi 0, %s106
    %s128 = sphi 0, %s130
    %s131 = sphi 0, %s128
    %s132 = sphi 0, %s131
    %s148 = sphi 0, %s132
    %s156 = sphi 0, %s158
    %s159 = sphi 0, %s156
    %s160 = sphi 0, %s159
    %s176 = sphi 0, %s160
    %s184 = sphi 0, %s186
    %s187 = sphi 0, %s184
    %s188 = sphi 0, %s187
    %s204 = sphi 0, %s188
  $region4: #{pointnetfeat_forward.4} parent=0 // loop_header_branch
    %16 = sbr.rel (%p14) target = $region8
  $region5: #{pointnetfeat_forward.4} parent=0 // loop_body
    %s18 = ssub.s32 %s13, 1
    %s19 = ssub.s32 %s13, 2
    %s26 = sadd.s32 1, %s21
    %p27 = scmp.ge.s32.totalorder %s26, 1
    %s28 = scalar_select %p27, 0, %s26
    %s29 = sadd.s32 1, %s20
    %s30 = scalar_select %p27, %s29, %s20
    %p31 = scmp.ge.s32.totalorder %s30, 2
    %s32 = scalar_select %p31, 0, %s30
    %s33 = ssub.s32 %s20, %s32
    %s34 = ssub.s32 %s21, %s28
    %s35 = sor.u32 %s33, %s34
    %p36 = scmp.eq.s32.totalorder %s35, 0
    %s38 = sadd.s32 %s37, 1
    %s39 = scalar_select %p36, %s37, %s38
    %p42 = pneg %p36
    %p43 = scmp.eq.s32.totalorder %s13, 1
    %p44 = por %p42, %p43
    %p45 = scmp.ne.s32.totalorder %s37, %s40
    %p46 = scmp.eq.s32.totalorder %s13, 0
    %p47 = por %p45, %p46
    %p48 = scmp.ne.s32.totalorder %s37, %s40
    %p49 = scmp.eq.s32.totalorder %s18, 1
    %p50 = por %p48, %p49
    %p51 = scmp.ne.s32.totalorder %s40, %s41
    %p52 = scmp.eq.s32.totalorder %s18, 0
    %p53 = por %p51, %p52
    %p54 = scmp.ne.s32.totalorder %s40, %s41
    %p55 = scmp.eq.s32.totalorder %s19, 1
    %p56 = por %p54, %p55
    %p58 = scmp.ne.s32.totalorder %s41, %s57
    %p59 = scmp.eq.s32.totalorder %s19, 0
    %p60 = por %p58, %p59
    %s62 = sadd.s32 %s61, 1
    %p65 = scmp.eq.s32.totalorder %s13, 1
    %p66 = scmp.ne.s32.totalorder %s61, %s63
    %p67 = scmp.eq.s32.totalorder %s13, 0
    %p68 = por %p66, %p67
    %p69 = scmp.ne.s32.totalorder %s61, %s63
    %p70 = scmp.eq.s32.totalorder %s18, 1
    %p71 = por %p69, %p70
    %p72 = scmp.ne.s32.totalorder %s63, %s64
    %p73 = scmp.eq.s32.totalorder %s18, 0
    %p74 = por %p72, %p73
    %p75 = scmp.ne.s32.totalorder %s63, %s64
    %p76 = scmp.eq.s32.totalorder %s19, 1
    %p77 = por %p75, %p76
    %p79 = scmp.ne.s32.totalorder %s64, %s78
    %p80 = scmp.eq.s32.totalorder %s19, 0
    %p81 = por %p79, %p80
    %s83 = sadd.s32 %s82, 1
    %p86 = scmp.eq.s32.totalorder %s13, 1
    %p87 = scmp.ne.s32.totalorder %s82, %s84
    %p88 = scmp.eq.s32.totalorder %s13, 0
    %p89 = por %p87, %p88
    %p90 = scmp.ne.s32.totalorder %s82, %s84
    %p91 = scmp.eq.s32.totalorder %s18, 1
    %p92 = por %p90, %p91
    %p93 = scmp.ne.s32.totalorder %s84, %s85
    %p94 = scmp.eq.s32.totalorder %s18, 0
    %p95 = por %p93, %p94
    %p96 = scmp.ne.s32.totalorder %s84, %s85
    %p97 = scmp.eq.s32.totalorder %s19, 1
    %p98 = por %p96, %p97
    %p100 = scmp.ne.s32.totalorder %s85, %s99
    %p101 = scmp.eq.s32.totalorder %s19, 0
    %p102 = por %p100, %p101
    %s104 = sadd.s32 %s103, 1
    %p107 = scmp.eq.s32.totalorder %s13, 1
    %p108 = scmp.ne.s32.totalorder %s103, %s105
    %p109 = scmp.eq.s32.totalorder %s13, 0
    %p110 = por %p108, %p109
    %p111 = scmp.ne.s32.totalorder %s103, %s105
    %p112 = scmp.eq.s32.totalorder %s18, 1
    %p113 = por %p111, %p112
    %p114 = scmp.ne.s32.totalorder %s105, %s106
    %p115 = scmp.eq.s32.totalorder %s18, 0
    %p116 = por %p114, %p115
    %p117 = scmp.ne.s32.totalorder %s105, %s106
    %p118 = scmp.eq.s32.totalorder %s19, 1
    %p119 = por %p117, %p118
    %p121 = scmp.ne.s32.totalorder %s106, %s120
    %p122 = scmp.eq.s32.totalorder %s19, 0
    %p123 = por %p121, %p122
    %s124 = ssub.s32 %s20, %s32
    %s125 = ssub.s32 %s21, %s28
    %s126 = sor.u32 %s124, %s125
    %p127 = scmp.eq.s32.totalorder %s126, 0
    %s129 = sadd.s32 %s128, 1
    %s130 = scalar_select %p127, %s128, %s129
    %p133 = pneg %p127
    %p134 = scmp.eq.s32.totalorder %s13, 1
    %p135 = por %p133, %p134
    %p136 = scmp.ne.s32.totalorder %s128, %s131
    %p137 = scmp.eq.s32.totalorder %s13, 0
    %p138 = por %p136, %p137
    %p139 = scmp.ne.s32.totalorder %s128, %s131
    %p140 = scmp.eq.s32.totalorder %s18, 1
    %p141 = por %p139, %p140
    %p142 = scmp.ne.s32.totalorder %s131, %s132
    %p143 = scmp.eq.s32.totalorder %s18, 0
    %p144 = por %p142, %p143
    %p145 = scmp.ne.s32.totalorder %s131, %s132
    %p146 = scmp.eq.s32.totalorder %s19, 1
    %p147 = por %p145, %p146
    %p149 = scmp.ne.s32.totalorder %s132, %s148
    %p150 = scmp.eq.s32.totalorder %s19, 0
    %p151 = por %p149, %p150
    %s152 = sadd.s32 %s20, %s21
    %s153 = sadd.s32 %s32, %s28
    %s154 = ssub.s32 %s152, %s153
    %p155 = scmp.eq.s32.totalorder %s154, 0
    %s157 = sadd.s32 %s156, 1
    %s158 = scalar_select %p155, %s156, %s157
    %p161 = pneg %p155
    %p162 = scmp.eq.s32.totalorder %s13, 1
    %p163 = por %p161, %p162
    %p164 = scmp.ne.s32.totalorder %s156, %s159
    %p165 = scmp.eq.s32.totalorder %s13, 0
    %p166 = por %p164, %p165
    %p167 = scmp.ne.s32.totalorder %s156, %s159
    %p168 = scmp.eq.s32.totalorder %s18, 1
    %p169 = por %p167, %p168
    %p170 = scmp.ne.s32.totalorder %s159, %s160
    %p171 = scmp.eq.s32.totalorder %s18, 0
    %p172 = por %p170, %p171
    %p173 = scmp.ne.s32.totalorder %s159, %s160
    %p174 = scmp.eq.s32.totalorder %s19, 1
    %p175 = por %p173, %p174
    %p177 = scmp.ne.s32.totalorder %s160, %s176
    %p178 = scmp.eq.s32.totalorder %s19, 0
    %p179 = por %p177, %p178
    %s180 = sadd.s32 %s20, %s21
    %s181 = sadd.s32 %s32, %s28
    %s182 = ssub.s32 %s180, %s181
    %p183 = scmp.eq.s32.totalorder %s182, 0
    %s185 = sadd.s32 %s184, 1
    %s186 = scalar_select %p183, %s184, %s185
    %p189 = pneg %p183
    %p190 = scmp.eq.s32.totalorder %s13, 1
    %p191 = por %p189, %p190
    %p192 = scmp.ne.s32.totalorder %s184, %s187
    %p193 = scmp.eq.s32.totalorder %s13, 0
    %p194 = por %p192, %p193
    %p195 = scmp.ne.s32.totalorder %s184, %s187
    %p196 = scmp.eq.s32.totalorder %s18, 1
    %p197 = por %p195, %p196
    %p198 = scmp.ne.s32.totalorder %s187, %s188
    %p199 = scmp.eq.s32.totalorder %s18, 0
    %p200 = por %p198, %p199
    %p201 = scmp.ne.s32.totalorder %s187, %s188
    %p202 = scmp.eq.s32.totalorder %s19, 1
    %p203 = por %p201, %p202
    %p205 = scmp.ne.s32.totalorder %s188, %s204
    %p206 = scmp.eq.s32.totalorder %s19, 0
    %p207 = por %p205, %p206
    %p208 = scmp.le.s32.totalorder 1, %s13
    %p209 = scmp.lt.s32.totalorder %s13, 3
    %p210 = pnand %p208, %p209
    %p211 = pneg %p210
    // Predicated region
    $region9: #{pointnetfeat_forward.4} parent=5 // pred_check
      _
    $region10: #{pointnetfeat_forward.4} parent=5 // pred_check_branch
      %213 = sbr.rel (%p210) target = $region12
    $region11: #{pointnetfeat_forward.4} parent=5 // pred_region
      %s214 = ssub.s32 %s13, 1
      // Predicated region
      $region13: #{pointnetfeat_forward.4} parent=11 // pred_check
        %p215 = pneg %p74
      $region14: #{pointnetfeat_forward.4} parent=11 // pred_check_branch
        %217 = sbr.rel (%p215) target = $region16
      $region15: #{pointnetfeat_forward.4} parent=11 // pred_region
        _
      $region16: #{pointnetfeat_forward.4} parent=11 // pred_fallthru
        _
      // Predicated region
      $region17: #{pointnetfeat_forward.4} parent=11 // pred_check
        %p218 = pneg %p95
      $region18: #{pointnetfeat_forward.4} parent=11 // pred_check_branch
        %220 = sbr.rel (%p218) target = $region20
      $region19: #{pointnetfeat_forward.4} parent=11 // pred_region
        _
      $region20: #{pointnetfeat_forward.4} parent=11 // pred_fallthru
        _
      // Predicated region
      $region21: #{pointnetfeat_forward.4} parent=11 // pred_check
        %p221 = pneg %p116
      $region22: #{pointnetfeat_forward.4} parent=11 // pred_check_branch
        %223 = sbr.rel (%p221) target = $region24
      $region23: #{pointnetfeat_forward.4} parent=11 // pred_region
        _
      $region24: #{pointnetfeat_forward.4} parent=11 // pred_fallthru
        _
    $region12: #{pointnetfeat_forward.4} parent=5 // pred_fallthru
      _
    %p224 = scmp.lt.s32.totalorder %s13, 2
    // Predicated region
    $region25: #{pointnetfeat_forward.4} parent=5 // pred_check
      %p225 = pneg %p224
    $region26: #{pointnetfeat_forward.4} parent=5 // pred_check_branch
      %227 = sbr.rel (%p225) target = $region28
    $region27: #{pointnetfeat_forward.4} parent=5 // pred_region
      // Predicated region
      $region29: #{pointnetfeat_forward.4} parent=27 // pred_check
        %p228 = pneg %p47
      $region30: #{pointnetfeat_forward.4} parent=27 // pred_check_branch
        %230 = sbr.rel (%p228) target = $region32
      $region31: #{pointnetfeat_forward.4} parent=27 // pred_region
        %s231 = smul.u32 3, %s21
        %p232 = scmp.lt.s32.totalorder %s20, 1
        %s233 = scalar_select %p232, %s20, 1
        %p234 = scmp.lt.s32.totalorder %s231, 2
        %s235 = scalar_select %p234, %s231, 2
        %s236 = smul.addr %s233, 3
        %s237 = sadd.s32 %s235, %s236
        %s238 = smul.addr %s237, 8
        %s239 = scalar_lea.vmem %s0, %s238
        %s240 = smul.u32 3, %s21
      $region32: #{pointnetfeat_forward.4} parent=27 // pred_fallthru
        _
    $region28: #{pointnetfeat_forward.4} parent=5 // pred_fallthru
      _
    %p241 = scmp.le.s32.totalorder 1, %s13
    %p242 = scmp.lt.s32.totalorder %s13, 3
    %p243 = pnand %p241, %p242
    %p244 = pneg %p243
    // Predicated region
    $region33: #{pointnetfeat_forward.4} parent=5 // pred_check
      _
    $region34: #{pointnetfeat_forward.4} parent=5 // pred_check_branch
      %246 = sbr.rel (%p243) target = $region36
    $region35: #{pointnetfeat_forward.4} parent=5 // pred_region
      %s247 = ssub.s32 %s13, 1
      %s248 = smul.u32 3, %s23
      %p249 = scmp.lt.s32.totalorder %s22, 1
      %s250 = scalar_select %p249, %s22, 1
      %p251 = scmp.lt.s32.totalorder %s248, 2
      %s252 = scalar_select %p251, %s248, 2
      %s253 = smul.addr %s250, 3
      %s254 = sadd.s32 %s252, %s253
      %s255 = smul.addr %s254, 8
      %s256 = scalar_lea.vmem %s0, %s255
      %p257 = pneg %p53
      %p258 = pneg %p50
      %p259 = pneg %p74
      %p260 = pneg %p71
      %p261 = pneg %p95
      %p262 = pneg %p92
      %p263 = pneg %p116
      %p264 = pneg %p113
      %p265 = pneg %p144
      %p266 = pneg %p141
      %s267 = smul.u32 3, %s23
      %p268 = scmp.lt.s32.totalorder %s22, 1
      %s269 = scalar_select %p268, %s22, 1
      %p270 = scmp.lt.s32.totalorder %s267, 2
      %s271 = scalar_select %p270, %s267, 2
      %s272 = smul.addr %s269, 3
      %s273 = sadd.s32 %s271, %s272
      %s274 = smul.addr %s273, 4
      %s275 = scalar_lea.vmem %s4, %s274
      %p276 = pneg %p172
      %p277 = pneg %p169
      %s278 = sadd.s32 %s22, %s23
      %p279 = scmp.lt.s32.totalorder %s278, 1
      %s280 = scalar_select %p279, %s278, 1
      %s281 = scalar_lea.vmem %s5, %s280
      %p282 = pneg %p200
      %p283 = pneg %p197
      %s284 = sadd.s32 %s22, %s23
      %p285 = scmp.lt.s32.totalorder %s284, 1
      %s286 = scalar_select %p285, %s284, 1
      %s287 = scalar_lea.vmem %s6, %s286
      %s288 = smul.u32 3, %s23
      %p289 = scmp.lt.s32.totalorder %s22, 1
      %s290 = scalar_select %p289, %s22, 1
      %p291 = scmp.lt.s32.totalorder %s288, 2
      %s292 = scalar_select %p291, %s288, 2
      %s293 = smul.addr %s290, 3
      %s294 = sadd.s32 %s292, %s293
      %s295 = smul.addr %s294, 8
      %s296 = scalar_lea.vmem %s0, %s295
      %s297 = smul.u32 3, %s23
      %s298 = smul.u32 3, %s23
      %p299 = scmp.lt.s32.totalorder %s22, 1
      %s300 = scalar_select %p299, %s22, 1
      %p301 = scmp.lt.s32.totalorder %s298, 2
      %s302 = scalar_select %p301, %s298, 2
      %s303 = smul.addr %s300, 3
      %s304 = sadd.s32 %s302, %s303
      %s305 = smul.addr %s304, 4
      %s306 = scalar_lea.vmem %s4, %s305
      %s307 = smul.u32 3, %s23
      %s308 = sadd.s32 %s22, %s23
      %p309 = scmp.lt.s32.totalorder %s308, 1
      %s310 = scalar_select %p309, %s308, 1
      %s311 = scalar_lea.vmem %s5, %s310
      %s312 = sadd.s32 %s22, %s23
      %s313 = sadd.s32 %s22, %s23
      %p314 = scmp.lt.s32.totalorder %s313, 1
      %s315 = scalar_select %p314, %s313, 1
      %s316 = scalar_lea.vmem %s6, %s315
      %s317 = sadd.s32 %s22, %s23
      %v319 = vld [vmem:[%s296] sm:$0xff]
      %v320 = vld [vmem:[%s296 + $0x8] sm:$0xff]
      %v321 = vld [vmem:[%s296 + $0x10] sm:$0xff]
      %v322 = vld [vmem:[%s1] sm:$0x1]
      %v324 = vlaneseq
      %v325 = vshrl.u32 %v324, 7
      %v326 = vsub.s32 0, %v325
      %v327 = vrot.slane %v322, %v326
      %v329 = vmul.f32 %v319, %v327
      %v330 = vmul.f32 %v320, %v327
      %v331 = vmul.f32 %v321, %v327
      %v332 = vld [vmem:[%s2] sm:$0x1]
      %v334 = vlaneseq
      %v335 = vshrl.u32 %v334, 7
      %v336 = vsub.s32 0, %v335
      %v337 = vrot.slane %v332, %v336
      %v339 = vadd.f32 %v329, %v337
      %v340 = vadd.f32 %v330, %v337
      %v341 = vadd.f32 %v331, %v337
      %v342 = vmax.f32 %v339, 0.0
      %v343 = vmax.f32 %v340, 0.0
      %v344 = vmax.f32 %v341, 0.0
      %v345 = vpack.c.bf16 %v343, %v342
      %v346 = vpack.c.bf16 %v344, %v344
      %v347 = vld [vmem:[%s3] sm:$0xf]
      %v348 = vld [vmem:[%s3 + $0x4] sm:$0xf]
      %v349 = vld [vmem:[%s3 + $0x8] sm:$0xf]
      %v350 = vld [vmem:[%s3 + $0xc] sm:$0xf]
      %v351 = vld [vmem:[%s3 + $0x10] sm:$0xf]
      %v352 = vld [vmem:[%s3 + $0x14] sm:$0xf]
      %v353 = vld [vmem:[%s3 + $0x18] sm:$0xf]
      %v354 = vld [vmem:[%s3 + $0x1c] sm:$0xf]
      %v363 = vunpack.c.l.b16 %v347
      %v364 = vunpack.c.l.b16 %v348
      %v365 = vunpack.c.l.b16 %v349
      %v366 = vunpack.c.l.b16 %v350
      %v367 = vunpack.c.l.b16 %v351
      %v368 = vunpack.c.l.b16 %v352
      %v369 = vunpack.c.l.b16 %v353
      %v370 = vunpack.c.l.b16 %v354
      %v371 = vpack.c.b16 %v364, %v363
      %v372 = vpack.c.b16 %v366, %v365
      %v373 = vpack.c.b16 %v368, %v367
      %v374 = vpack.c.b16 %v370, %v369
      %vm379 = vcmask 523264
      %v381 = vsel %vm379, %v345, 0
      %v384 = vsel %vm379, %v346, 0
      %386 = vmatprep.subr.bf16.mxu0 0
      %387 = vmatpush1.bf16.msra.mxu0 0
      %388 = vmatprep.subr.bf16.mxu0 0
      %389 = vmatpush1.bf16.msra.mxu0 0
      %390 = vmatprep.subr.bf16.mxu0 0
      %391 = vmatpush1.bf16.msra.mxu0 0
      %392 = vmatprep.subr.bf16.mxu0 0
      %393 = vmatpush1.bf16.msra.mxu0 0
      %394 = vmatprep.subr.bf16.mxu0 0
      %395 = vmatpush1.bf16.msra.mxu0 %v374
      %396 = vmatprep.subr.bf16.mxu0 0
      %397 = vmatpush1.bf16.msra.mxu0 %v373
      %398 = vmatprep.subr.bf16.mxu0 0
      %399 = vmatpush1.bf16.msra.mxu0 %v372
      %400 = vmatprep.subr.bf16.mxu0 0
      %401 = vmatpush1.bf16.msra.mxu0 %v371
      %402 = vmatprep.subr.bf16.mxu0 0
      %403 = vmatpush2.bf16.msra.mxu0 0
      %404 = vmatprep.subr.bf16.mxu0 0
      %405 = vmatpush2.bf16.msra.mxu0 0
      %406 = vmatprep.subr.bf16.mxu0 0
      %407 = vmatpush2.bf16.msra.mxu0 0
      %408 = vmatprep.subr.bf16.mxu0 0
      %409 = vmatpush2.bf16.msra.mxu0 0
      %410 = vmatprep.subr.bf16.mxu0 0
      %411 = vmatpush2.bf16.msra.mxu0 0
      %412 = vmatprep.subr.bf16.mxu0 0
      %413 = vmatpush2.bf16.msra.mxu0 0
      %414 = vmatprep.subr.bf16.mxu0 0
      %415 = vmatpush2.bf16.msra.mxu0 0
      %416 = vmatprep.subr.bf16.mxu0 0
      %417 = vmatpush2.bf16.msra.mxu0 0
      %418 = vmatprep.mubr.bf16.mxu0 0
      %419 = vmatmul.mubr.bf16.gmra.mxu0 %v381
      %v420 = vpop.f32.mrf.mxu0
      %v421 = vadd.f32 0.0, %v420
      %v422 = vpop.f32.mrf.mxu0
      %v423 = vpop.f32.mrf.mxu0
      %v424 = vadd.f32 0.0, %v423
      %v425 = vpop.f32.mrf.mxu0
      %426 = vmatprep.mubr.bf16.mxu0 0
      %427 = vmatmul.mubr.bf16.gmra.mxu0 %v384
      %v428 = vpop.f32.mrf.mxu0
      %v429 = vadd.f32 0.0, %v428
      %v430 = vpop.f32.mrf.mxu0
      %v431 = vpop.f32.mrf.mxu0
      %v432 = vpop.f32.mrf.mxu0
      %433 = vdwg.mxu0
      %v434 = vpack.c.bf16 %v424, %v421
      %v435 = vpack.c.bf16 %v429, %v429
      %v438 = vunpack.c.l.b16 %v434
      %v439 = vunpack.c.h.b16 %v434
      %v440 = vunpack.c.l.b16 %v435
      %v441 = vpack.c.b16 %v438, %v438
      %v442 = vpack.c.b16 %v439, %v439
      %v443 = vpack.c.b16 %v440, %v440
      %447 = vst [vmem:[%s306] sm:$0xf] %v441
      %448 = vst [vmem:[%s306 + $0x4] sm:$0xf] %v442
      %449 = vst [vmem:[%s306 + $0x8] sm:$0xf] %v443
      %s450 = smul.u32 %s23, 24
      %v451 = vlaneseq
      %v452 = vshrl.u32 %v451, 7
      %v453 = vadd.s32 %v452, 8
      %v454 = vadd.s32 %v452, 16
      %v455 = vstv %s450
      %v456 = vadd.s32 %v455, %v452
      %v457 = vadd.s32 %v455, %v453
      %v458 = vadd.s32 %v455, %v454
      %vm459 = vcmp.lt.s32.totalorder %v456, 20
      %vm460 = vcmp.lt.s32.totalorder %v457, 20
      %vm461 = vcmp.lt.s32.totalorder %v458, 20
      %v462 = vsel %vm459, 1, 0
      %v463 = vsel %vm460, 1, 0
      %v464 = vsel %vm461, 1, 0
      %vm465 = vcmp.eq.s32.totalorder %v462, 1
      %vm466 = vcmp.eq.s32.totalorder %v463, 1
      %vm467 = vcmp.eq.s32.totalorder %v464, 1
      %v468 = vsel %vm465, %v421, 0.0
      %v469 = vsel %vm466, %v424, 0.0
      %v470 = vsel %vm467, %v429, 0.0
      %v471 = vadd.f32 %v468, %v469
      %v472 = vadd.f32 %v471, %v470
      %v473 = vrot.slane %v472, 4
      %v474 = vadd.f32 %v472, %v473
      %v475 = vrot.slane %v474, 2
      %v476 = vadd.f32 %v474, %v475
      %v477 = vrot.slane %v476, 1
      %v478 = vadd.f32 %v476, %v477
      %v479 = vmul.f32 %v468, %v468
      %v480 = vmul.f32 %v469, %v469
      %v481 = vmul.f32 %v470, %v470
      %v482 = vadd.f32 %v479, %v480
      %v483 = vadd.f32 %v482, %v481
      %v484 = vrot.slane %v483, 4
      %v485 = vadd.f32 %v483, %v484
      %v486 = vrot.slane %v485, 2
      %v487 = vadd.f32 %v485, %v486
      %v488 = vrot.slane %v487, 1
      %v489 = vadd.f32 %v487, %v488
      %490 = vst [vmem:[%s311] sm:$0x1] %v478
      %491 = vst [vmem:[%s316] sm:$0x1] %v489
      %s492 = smul.u32 3, %s23
      %p493 = scmp.lt.s32.totalorder %s22, 1
      %s494 = scalar_select %p493, %s22, 1
      %p495 = scmp.lt.s32.totalorder %s492, 2
      %s496 = scalar_select %p495, %s492, 2
      %s497 = smul.addr %s494, 3
      %s498 = sadd.s32 %s496, %s497
      %s499 = smul.addr %s498, 4
      %s500 = scalar_lea.vmem %s4, %s499
      %s501 = sadd.s32 %s22, %s23
      %p502 = scmp.lt.s32.totalorder %s501, 1
      %s503 = scalar_select %p502, %s501, 1
      %s504 = scalar_lea.vmem %s5, %s503
      %s505 = sadd.s32 %s22, %s23
      %p506 = scmp.lt.s32.totalorder %s505, 1
      %s507 = scalar_select %p506, %s505, 1
      %s508 = scalar_lea.vmem %s6, %s507
      // Predicated region
      $region37: #{pointnetfeat_forward.4} parent=35 // pred_check
        %p509 = pneg %p141
      $region38: #{pointnetfeat_forward.4} parent=35 // pred_check_branch
        %511 = sbr.rel (%p509) target = $region40
      $region39: #{pointnetfeat_forward.4} parent=35 // pred_region
        %s512 = smul.u32 3, %s23
      $region40: #{pointnetfeat_forward.4} parent=35 // pred_fallthru
        _
      // Predicated region
      $region41: #{pointnetfeat_forward.4} parent=35 // pred_check
        %p513 = pneg %p169
      $region42: #{pointnetfeat_forward.4} parent=35 // pred_check_branch
        %515 = sbr.rel (%p513) target = $region44
      $region43: #{pointnetfeat_forward.4} parent=35 // pred_region
        %s516 = sadd.s32 %s22, %s23
      $region44: #{pointnetfeat_forward.4} parent=35 // pred_fallthru
        _
      // Predicated region
      $region45: #{pointnetfeat_forward.4} parent=35 // pred_check
        %p517 = pneg %p197
      $region46: #{pointnetfeat_forward.4} parent=35 // pred_check_branch
        %519 = sbr.rel (%p517) target = $region48
      $region47: #{pointnetfeat_forward.4} parent=35 // pred_region
        %s520 = sadd.s32 %s22, %s23
      $region48: #{pointnetfeat_forward.4} parent=35 // pred_fallthru
        _
    $region36: #{pointnetfeat_forward.4} parent=5 // pred_fallthru
      _
    %p521 = scmp.le.s32.totalorder 2, %s13
    // Predicated region
    $region49: #{pointnetfeat_forward.4} parent=5 // pred_check
      %p522 = pneg %p521
    $region50: #{pointnetfeat_forward.4} parent=5 // pred_check_branch
      %524 = sbr.rel (%p522) target = $region52
    $region51: #{pointnetfeat_forward.4} parent=5 // pred_region
      %s525 = ssub.s32 %s13, 2
      // Predicated region
      $region53: #{pointnetfeat_forward.4} parent=51 // pred_check
        %p526 = pneg %p147
      $region54: #{pointnetfeat_forward.4} parent=51 // pred_check_branch
        %528 = sbr.rel (%p526) target = $region56
      $region55: #{pointnetfeat_forward.4} parent=51 // pred_region
        %s529 = smul.u32 3, %s25
        %p530 = scmp.lt.s32.totalorder %s24, 1
        %s531 = scalar_select %p530, %s24, 1
        %p532 = scmp.lt.s32.totalorder %s529, 2
        %s533 = scalar_select %p532, %s529, 2
        %s534 = smul.addr %s531, 3
        %s535 = sadd.s32 %s533, %s534
        %s536 = smul.addr %s535, 4
        %s537 = scalar_lea.vmem %s4, %s536
      $region56: #{pointnetfeat_forward.4} parent=51 // pred_fallthru
        _
      // Predicated region
      $region57: #{pointnetfeat_forward.4} parent=51 // pred_check
        %p538 = pneg %p175
      $region58: #{pointnetfeat_forward.4} parent=51 // pred_check_branch
        %540 = sbr.rel (%p538) target = $region60
      $region59: #{pointnetfeat_forward.4} parent=51 // pred_region
        %s541 = sadd.s32 %s24, %s25
        %p542 = scmp.lt.s32.totalorder %s541, 1
        %s543 = scalar_select %p542, %s541, 1
        %s544 = scalar_lea.vmem %s5, %s543
      $region60: #{pointnetfeat_forward.4} parent=51 // pred_fallthru
        _
      // Predicated region
      $region61: #{pointnetfeat_forward.4} parent=51 // pred_check
        %p545 = pneg %p203
      $region62: #{pointnetfeat_forward.4} parent=51 // pred_check_branch
        %547 = sbr.rel (%p545) target = $region64
      $region63: #{pointnetfeat_forward.4} parent=51 // pred_region
        %s548 = sadd.s32 %s24, %s25
        %p549 = scmp.lt.s32.totalorder %s548, 1
        %s550 = scalar_select %p549, %s548, 1
        %s551 = scalar_lea.vmem %s6, %s550
      $region64: #{pointnetfeat_forward.4} parent=51 // pred_fallthru
        _
    $region52: #{pointnetfeat_forward.4} parent=5 // pred_fallthru
      _
  $region6: #{pointnetfeat_forward.4} parent=0 // loop_footer
    %s17 = sadd.s32 1, %s13
  $region7: #{pointnetfeat_forward.4} parent=0 // loop_footer_branch
    %12 = sbr.rel target = $region3
  $region8: #{pointnetfeat_forward.4} parent=0 // loop_exit
    _

// kernel: pointnetfeat_forward.5
$region0: #{pointnetfeat_forward.5}
  #allocation0 [shape = 'u32[]', space=smem, size = 0x4, offset = 0x4, fixed_abs, tag = 'smem constant byte address 0x4 - core index']
  #allocation1 [shape = 'u32[144,128]{1,0:T(1,128)}', space=vmem, size = 0x12000, scoped, tag = 'internal scratch']
  %s0 = inlined_call_operand.vmem [shape: bf16[2,24,128], index: 0, kind: input, shape index: {}]
  %s1 = inlined_call_operand.vmem [shape: f32[1,128], index: 1, kind: input, shape index: {}]
  %s2 = inlined_call_operand.vmem [shape: f32[1,128], index: 2, kind: input, shape index: {}]
  %s3 = inlined_call_operand.vmem [shape: bf16[128,1024], index: 3, kind: input, shape index: {}]
  %s4 = inlined_call_operand.vmem [shape: f32[2,1,1024], index: 4, kind: output, shape index: {0}]
  %s5 = inlined_call_operand.vmem [shape: f32[2,1,1024], index: 5, kind: output, shape index: {1}]
  %s6 = inlined_call_operand.vmem [shape: f32[2,1,1024], index: 6, kind: output, shape index: {2}]
  %s7 = inlined_call_operand.vmem [shape: f32[2,1,1024], index: 7, kind: output, shape index: {3}]
  %8 = xla_tuple %s4, %s5, %s6, %s7
  %s9 = sld [smem:[#allocation0]]
  $region73: #{pointnetfeat_forward.5} parent=0
    _
  %s11 = ssub.s32 1, %s9
  %s12 = scalar_select 0, %s11, %s9
  loop: start=0, step=1, limit=4
  $region2: #{pointnetfeat_forward.5} parent=0 // loop_pre_header
    _
  $region3: #{pointnetfeat_forward.5} parent=0 // loop_header
    %s14 = sphi 0, %s18
    %p15 = scmp.ge.s32.totalorder %s14, 4
    %s21 = sphi 0, %s33
    %s22 = sphi 0, %s29
    %s23 = sphi 0, %s21
    %s24 = sphi 0, %s22
    %s25 = sphi 0, %s23
    %s26 = sphi 0, %s24
    %s38 = sphi 0, %s40
    %s41 = sphi 0, %s38
    %s42 = sphi 0, %s41
    %s58 = sphi 0, %s42
    %s62 = sphi 0, %s62
    %s64 = sphi 0, %s62
    %s65 = sphi 0, %s64
    %s79 = sphi 0, %s65
    %s83 = sphi 0, %s83
    %s85 = sphi 0, %s83
    %s86 = sphi 0, %s85
    %s100 = sphi 0, %s86
    %s104 = sphi 0, %s104
    %s106 = sphi 0, %s104
    %s107 = sphi 0, %s106
    %s121 = sphi 0, %s107
    %s129 = sphi 0, %s131
    %s132 = sphi 0, %s129
    %s133 = sphi 0, %s132
    %s149 = sphi 0, %s133
    %s157 = sphi 0, %s159
    %s160 = sphi 0, %s157
    %s161 = sphi 0, %s160
    %s177 = sphi 0, %s161
    %s185 = sphi 0, %s187
    %s188 = sphi 0, %s185
    %s189 = sphi 0, %s188
    %s205 = sphi 0, %s189
    %s213 = sphi 0, %s215
    %s216 = sphi 0, %s213
    %s217 = sphi 0, %s216
    %s233 = sphi 0, %s217
  $region4: #{pointnetfeat_forward.5} parent=0 // loop_header_branch
    %17 = sbr.rel (%p15) target = $region8
  $region5: #{pointnetfeat_forward.5} parent=0 // loop_body
    %s19 = ssub.s32 %s14, 1
    %s20 = ssub.s32 %s14, 2
    %s27 = sadd.s32 1, %s22
    %p28 = scmp.ge.s32.totalorder %s27, 1
    %s29 = scalar_select %p28, 0, %s27
    %s30 = sadd.s32 1, %s21
    %s31 = scalar_select %p28, %s30, %s21
    %p32 = scmp.ge.s32.totalorder %s31, 2
    %s33 = scalar_select %p32, 0, %s31
    %s34 = ssub.s32 %s21, %s33
    %s35 = ssub.s32 %s22, %s29
    %s36 = sor.u32 %s34, %s35
    %p37 = scmp.eq.s32.totalorder %s36, 0
    %s39 = sadd.s32 %s38, 1
    %s40 = scalar_select %p37, %s38, %s39
    %p43 = pneg %p37
    %p44 = scmp.eq.s32.totalorder %s14, 1
    %p45 = por %p43, %p44
    %p46 = scmp.ne.s32.totalorder %s38, %s41
    %p47 = scmp.eq.s32.totalorder %s14, 0
    %p48 = por %p46, %p47
    %p49 = scmp.ne.s32.totalorder %s38, %s41
    %p50 = scmp.eq.s32.totalorder %s19, 1
    %p51 = por %p49, %p50
    %p52 = scmp.ne.s32.totalorder %s41, %s42
    %p53 = scmp.eq.s32.totalorder %s19, 0
    %p54 = por %p52, %p53
    %p55 = scmp.ne.s32.totalorder %s41, %s42
    %p56 = scmp.eq.s32.totalorder %s20, 1
    %p57 = por %p55, %p56
    %p59 = scmp.ne.s32.totalorder %s42, %s58
    %p60 = scmp.eq.s32.totalorder %s20, 0
    %p61 = por %p59, %p60
    %s63 = sadd.s32 %s62, 1
    %p66 = scmp.eq.s32.totalorder %s14, 1
    %p67 = scmp.ne.s32.totalorder %s62, %s64
    %p68 = scmp.eq.s32.totalorder %s14, 0
    %p69 = por %p67, %p68
    %p70 = scmp.ne.s32.totalorder %s62, %s64
    %p71 = scmp.eq.s32.totalorder %s19, 1
    %p72 = por %p70, %p71
    %p73 = scmp.ne.s32.totalorder %s64, %s65
    %p74 = scmp.eq.s32.totalorder %s19, 0
    %p75 = por %p73, %p74
    %p76 = scmp.ne.s32.totalorder %s64, %s65
    %p77 = scmp.eq.s32.totalorder %s20, 1
    %p78 = por %p76, %p77
    %p80 = scmp.ne.s32.totalorder %s65, %s79
    %p81 = scmp.eq.s32.totalorder %s20, 0
    %p82 = por %p80, %p81
    %s84 = sadd.s32 %s83, 1
    %p87 = scmp.eq.s32.totalorder %s14, 1
    %p88 = scmp.ne.s32.totalorder %s83, %s85
    %p89 = scmp.eq.s32.totalorder %s14, 0
    %p90 = por %p88, %p89
    %p91 = scmp.ne.s32.totalorder %s83, %s85
    %p92 = scmp.eq.s32.totalorder %s19, 1
    %p93 = por %p91, %p92
    %p94 = scmp.ne.s32.totalorder %s85, %s86
    %p95 = scmp.eq.s32.totalorder %s19, 0
    %p96 = por %p94, %p95
    %p97 = scmp.ne.s32.totalorder %s85, %s86
    %p98 = scmp.eq.s32.totalorder %s20, 1
    %p99 = por %p97, %p98
    %p101 = scmp.ne.s32.totalorder %s86, %s100
    %p102 = scmp.eq.s32.totalorder %s20, 0
    %p103 = por %p101, %p102
    %s105 = sadd.s32 %s104, 1
    %p108 = scmp.eq.s32.totalorder %s14, 1
    %p109 = scmp.ne.s32.totalorder %s104, %s106
    %p110 = scmp.eq.s32.totalorder %s14, 0
    %p111 = por %p109, %p110
    %p112 = scmp.ne.s32.totalorder %s104, %s106
    %p113 = scmp.eq.s32.totalorder %s19, 1
    %p114 = por %p112, %p113
    %p115 = scmp.ne.s32.totalorder %s106, %s107
    %p116 = scmp.eq.s32.totalorder %s19, 0
    %p117 = por %p115, %p116
    %p118 = scmp.ne.s32.totalorder %s106, %s107
    %p119 = scmp.eq.s32.totalorder %s20, 1
    %p120 = por %p118, %p119
    %p122 = scmp.ne.s32.totalorder %s107, %s121
    %p123 = scmp.eq.s32.totalorder %s20, 0
    %p124 = por %p122, %p123
    %s125 = sadd.s32 %s21, %s22
    %s126 = sadd.s32 %s33, %s29
    %s127 = ssub.s32 %s125, %s126
    %p128 = scmp.eq.s32.totalorder %s127, 0
    %s130 = sadd.s32 %s129, 1
    %s131 = scalar_select %p128, %s129, %s130
    %p134 = pneg %p128
    %p135 = scmp.eq.s32.totalorder %s14, 1
    %p136 = por %p134, %p135
    %p137 = scmp.ne.s32.totalorder %s129, %s132
    %p138 = scmp.eq.s32.totalorder %s14, 0
    %p139 = por %p137, %p138
    %p140 = scmp.ne.s32.totalorder %s129, %s132
    %p141 = scmp.eq.s32.totalorder %s19, 1
    %p142 = por %p140, %p141
    %p143 = scmp.ne.s32.totalorder %s132, %s133
    %p144 = scmp.eq.s32.totalorder %s19, 0
    %p145 = por %p143, %p144
    %p146 = scmp.ne.s32.totalorder %s132, %s133
    %p147 = scmp.eq.s32.totalorder %s20, 1
    %p148 = por %p146, %p147
    %p150 = scmp.ne.s32.totalorder %s133, %s149
    %p151 = scmp.eq.s32.totalorder %s20, 0
    %p152 = por %p150, %p151
    %s153 = sadd.s32 %s21, %s22
    %s154 = sadd.s32 %s33, %s29
    %s155 = ssub.s32 %s153, %s154
    %p156 = scmp.eq.s32.totalorder %s155, 0
    %s158 = sadd.s32 %s157, 1
    %s159 = scalar_select %p156, %s157, %s158
    %p162 = pneg %p156
    %p163 = scmp.eq.s32.totalorder %s14, 1
    %p164 = por %p162, %p163
    %p165 = scmp.ne.s32.totalorder %s157, %s160
    %p166 = scmp.eq.s32.totalorder %s14, 0
    %p167 = por %p165, %p166
    %p168 = scmp.ne.s32.totalorder %s157, %s160
    %p169 = scmp.eq.s32.totalorder %s19, 1
    %p170 = por %p168, %p169
    %p171 = scmp.ne.s32.totalorder %s160, %s161
    %p172 = scmp.eq.s32.totalorder %s19, 0
    %p173 = por %p171, %p172
    %p174 = scmp.ne.s32.totalorder %s160, %s161
    %p175 = scmp.eq.s32.totalorder %s20, 1
    %p176 = por %p174, %p175
    %p178 = scmp.ne.s32.totalorder %s161, %s177
    %p179 = scmp.eq.s32.totalorder %s20, 0
    %p180 = por %p178, %p179
    %s181 = sadd.s32 %s21, %s22
    %s182 = sadd.s32 %s33, %s29
    %s183 = ssub.s32 %s181, %s182
    %p184 = scmp.eq.s32.totalorder %s183, 0
    %s186 = sadd.s32 %s185, 1
    %s187 = scalar_select %p184, %s185, %s186
    %p190 = pneg %p184
    %p191 = scmp.eq.s32.totalorder %s14, 1
    %p192 = por %p190, %p191
    %p193 = scmp.ne.s32.totalorder %s185, %s188
    %p194 = scmp.eq.s32.totalorder %s14, 0
    %p195 = por %p193, %p194
    %p196 = scmp.ne.s32.totalorder %s185, %s188
    %p197 = scmp.eq.s32.totalorder %s19, 1
    %p198 = por %p196, %p197
    %p199 = scmp.ne.s32.totalorder %s188, %s189
    %p200 = scmp.eq.s32.totalorder %s19, 0
    %p201 = por %p199, %p200
    %p202 = scmp.ne.s32.totalorder %s188, %s189
    %p203 = scmp.eq.s32.totalorder %s20, 1
    %p204 = por %p202, %p203
    %p206 = scmp.ne.s32.totalorder %s189, %s205
    %p207 = scmp.eq.s32.totalorder %s20, 0
    %p208 = por %p206, %p207
    %s209 = sadd.s32 %s21, %s22
    %s210 = sadd.s32 %s33, %s29
    %s211 = ssub.s32 %s209, %s210
    %p212 = scmp.eq.s32.totalorder %s211, 0
    %s214 = sadd.s32 %s213, 1
    %s215 = scalar_select %p212, %s213, %s214
    %p218 = pneg %p212
    %p219 = scmp.eq.s32.totalorder %s14, 1
    %p220 = por %p218, %p219
    %p221 = scmp.ne.s32.totalorder %s213, %s216
    %p222 = scmp.eq.s32.totalorder %s14, 0
    %p223 = por %p221, %p222
    %p224 = scmp.ne.s32.totalorder %s213, %s216
    %p225 = scmp.eq.s32.totalorder %s19, 1
    %p226 = por %p224, %p225
    %p227 = scmp.ne.s32.totalorder %s216, %s217
    %p228 = scmp.eq.s32.totalorder %s19, 0
    %p229 = por %p227, %p228
    %p230 = scmp.ne.s32.totalorder %s216, %s217
    %p231 = scmp.eq.s32.totalorder %s20, 1
    %p232 = por %p230, %p231
    %p234 = scmp.ne.s32.totalorder %s217, %s233
    %p235 = scmp.eq.s32.totalorder %s20, 0
    %p236 = por %p234, %p235
    %p237 = scmp.le.s32.totalorder 1, %s14
    %p238 = scmp.lt.s32.totalorder %s14, 3
    %p239 = pnand %p237, %p238
    %p240 = pneg %p239
    // Predicated region
    $region9: #{pointnetfeat_forward.5} parent=5 // pred_check
      _
    $region10: #{pointnetfeat_forward.5} parent=5 // pred_check_branch
      %242 = sbr.rel (%p239) target = $region12
    $region11: #{pointnetfeat_forward.5} parent=5 // pred_region
      %s243 = ssub.s32 %s14, 1
      // Predicated region
      $region13: #{pointnetfeat_forward.5} parent=11 // pred_check
        %p244 = pneg %p75
      $region14: #{pointnetfeat_forward.5} parent=11 // pred_check_branch
        %246 = sbr.rel (%p244) target = $region16
      $region15: #{pointnetfeat_forward.5} parent=11 // pred_region
        _
      $region16: #{pointnetfeat_forward.5} parent=11 // pred_fallthru
        _
      // Predicated region
      $region17: #{pointnetfeat_forward.5} parent=11 // pred_check
        %p247 = pneg %p96
      $region18: #{pointnetfeat_forward.5} parent=11 // pred_check_branch
        %249 = sbr.rel (%p247) target = $region20
      $region19: #{pointnetfeat_forward.5} parent=11 // pred_region
        _
      $region20: #{pointnetfeat_forward.5} parent=11 // pred_fallthru
        _
      // Predicated region
      $region21: #{pointnetfeat_forward.5} parent=11 // pred_check
        %p250 = pneg %p117
      $region22: #{pointnetfeat_forward.5} parent=11 // pred_check_branch
        %252 = sbr.rel (%p250) target = $region24
      $region23: #{pointnetfeat_forward.5} parent=11 // pred_region
        _
      $region24: #{pointnetfeat_forward.5} parent=11 // pred_fallthru
        _
    $region12: #{pointnetfeat_forward.5} parent=5 // pred_fallthru
      _
    %p253 = scmp.lt.s32.totalorder %s14, 2
    // Predicated region
    $region25: #{pointnetfeat_forward.5} parent=5 // pred_check
      %p254 = pneg %p253
    $region26: #{pointnetfeat_forward.5} parent=5 // pred_check_branch
      %256 = sbr.rel (%p254) target = $region28
    $region27: #{pointnetfeat_forward.5} parent=5 // pred_region
      // Predicated region
      $region29: #{pointnetfeat_forward.5} parent=27 // pred_check
        %p257 = pneg %p48
      $region30: #{pointnetfeat_forward.5} parent=27 // pred_check_branch
        %259 = sbr.rel (%p257) target = $region32
      $region31: #{pointnetfeat_forward.5} parent=27 // pred_region
        %s260 = smul.u32 3, %s22
        %p261 = scmp.lt.s32.totalorder %s21, 1
        %s262 = scalar_select %p261, %s21, 1
        %p263 = scmp.lt.s32.totalorder %s260, 2
        %s264 = scalar_select %p263, %s260, 2
        %s265 = smul.addr %s262, 3
        %s266 = sadd.s32 %s264, %s265
        %s267 = smul.addr %s266, 4
        %s268 = scalar_lea.vmem %s0, %s267
        %s269 = smul.u32 3, %s22
      $region32: #{pointnetfeat_forward.5} parent=27 // pred_fallthru
        _
    $region28: #{pointnetfeat_forward.5} parent=5 // pred_fallthru
      _
    %p270 = scmp.le.s32.totalorder 1, %s14
    %p271 = scmp.lt.s32.totalorder %s14, 3
    %p272 = pnand %p270, %p271
    %p273 = pneg %p272
    // Predicated region
    $region33: #{pointnetfeat_forward.5} parent=5 // pred_check
      _
    $region34: #{pointnetfeat_forward.5} parent=5 // pred_check_branch
      %275 = sbr.rel (%p272) target = $region36
    $region35: #{pointnetfeat_forward.5} parent=5 // pred_region
      %s276 = ssub.s32 %s14, 1
      %s277 = smul.u32 3, %s24
      %p278 = scmp.lt.s32.totalorder %s23, 1
      %s279 = scalar_select %p278, %s23, 1
      %p280 = scmp.lt.s32.totalorder %s277, 2
      %s281 = scalar_select %p280, %s277, 2
      %s282 = smul.addr %s279, 3
      %s283 = sadd.s32 %s281, %s282
      %s284 = smul.addr %s283, 4
      %s285 = scalar_lea.vmem %s0, %s284
      %p286 = pneg %p54
      %p287 = pneg %p51
      %p288 = pneg %p75
      %p289 = pneg %p72
      %p290 = pneg %p96
      %p291 = pneg %p93
      %p292 = pneg %p117
      %p293 = pneg %p114
      %p294 = pneg %p145
      %p295 = pneg %p142
      %s296 = sadd.s32 %s23, %s24
      %p297 = scmp.lt.s32.totalorder %s296, 1
      %s298 = scalar_select %p297, %s296, 1
      %s299 = smul.addr %s298, 8
      %s300 = scalar_lea.vmem %s4, %s299
      %p301 = pneg %p173
      %p302 = pneg %p170
      %s303 = sadd.s32 %s23, %s24
      %p304 = scmp.lt.s32.totalorder %s303, 1
      %s305 = scalar_select %p304, %s303, 1
      %s306 = smul.addr %s305, 8
      %s307 = scalar_lea.vmem %s5, %s306
      %p308 = pneg %p201
      %p309 = pneg %p198
      %s310 = sadd.s32 %s23, %s24
      %p311 = scmp.lt.s32.totalorder %s310, 1
      %s312 = scalar_select %p311, %s310, 1
      %s313 = smul.addr %s312, 8
      %s314 = scalar_lea.vmem %s6, %s313
      %p315 = pneg %p229
      %p316 = pneg %p226
      %s317 = sadd.s32 %s23, %s24
      %p318 = scmp.lt.s32.totalorder %s317, 1
      %s319 = scalar_select %p318, %s317, 1
      %s320 = smul.addr %s319, 8
      %s321 = scalar_lea.vmem %s7, %s320
      %s322 = smul.u32 3, %s24
      %p323 = scmp.lt.s32.totalorder %s23, 1
      %s324 = scalar_select %p323, %s23, 1
      %p325 = scmp.lt.s32.totalorder %s322, 2
      %s326 = scalar_select %p325, %s322, 2
      %s327 = smul.addr %s324, 3
      %s328 = sadd.s32 %s326, %s327
      %s329 = smul.addr %s328, 4
      %s330 = scalar_lea.vmem %s0, %s329
      %s331 = smul.u32 3, %s24
      %s332 = sadd.s32 %s23, %s24
      %p333 = scmp.lt.s32.totalorder %s332, 1
      %s334 = scalar_select %p333, %s332, 1
      %s335 = smul.addr %s334, 8
      %s336 = scalar_lea.vmem %s4, %s335
      %s337 = sadd.s32 %s23, %s24
      %s338 = sadd.s32 %s23, %s24
      %p339 = scmp.lt.s32.totalorder %s338, 1
      %s340 = scalar_select %p339, %s338, 1
      %s341 = smul.addr %s340, 8
      %s342 = scalar_lea.vmem %s5, %s341
      %s343 = sadd.s32 %s23, %s24
      %s344 = sadd.s32 %s23, %s24
      %p345 = scmp.lt.s32.totalorder %s344, 1
      %s346 = scalar_select %p345, %s344, 1
      %s347 = smul.addr %s346, 8
      %s348 = scalar_lea.vmem %s6, %s347
      %s349 = sadd.s32 %s23, %s24
      %s350 = sadd.s32 %s23, %s24
      %p351 = scmp.lt.s32.totalorder %s350, 1
      %s352 = scalar_select %p351, %s350, 1
      %s353 = smul.addr %s352, 8
      %s354 = scalar_lea.vmem %s7, %s353
      %s355 = sadd.s32 %s23, %s24
      %v357 = vld [vmem:[%s330] sm:$0xf]
      %v358 = vld [vmem:[%s330 + $0x4] sm:$0xf]
      %v359 = vld [vmem:[%s330 + $0x8] sm:$0xf]
      %v360 = vunpack.c.l.bf16 %v357
      %v361 = vunpack.c.l.bf16 %v358
      %v362 = vunpack.c.l.bf16 %v359
      %v363 = vld [vmem:[%s1] sm:$0x1]
      %v365 = vlaneseq
      %v366 = vshrl.u32 %v365, 7
      %v367 = vsub.s32 0, %v366
      %v368 = vrot.slane %v363, %v367
      %v370 = vmul.f32 %v360, %v368
      %v371 = vmul.f32 %v361, %v368
      %v372 = vmul.f32 %v362, %v368
      %v373 = vld [vmem:[%s2] sm:$0x1]
      %v375 = vlaneseq
      %v376 = vshrl.u32 %v375, 7
      %v377 = vsub.s32 0, %v376
      %v378 = vrot.slane %v373, %v377
      %v380 = vadd.f32 %v370, %v378
      %v381 = vadd.f32 %v371, %v378
      %v382 = vadd.f32 %v372, %v378
      %v383 = vmax.f32 %v380, 0.0
      %v384 = vmax.f32 %v381, 0.0
      %v385 = vmax.f32 %v382, 0.0
      %v386 = vpack.c.bf16 %v384, %v383
      %v387 = vpack.c.bf16 %v385, %v385
      %v388 = vld [vmem:[%s3] sm:$0xff]
      %v389 = vld [vmem:[%s3 + $0x8] sm:$0xff]
      %v390 = vld [vmem:[%s3 + $0x10] sm:$0xff]
      %v391 = vld [vmem:[%s3 + $0x18] sm:$0xff]
      %v392 = vld [vmem:[%s3 + $0x20] sm:$0xff]
      %v393 = vld [vmem:[%s3 + $0x28] sm:$0xff]
      %v394 = vld [vmem:[%s3 + $0x30] sm:$0xff]
      %v395 = vld [vmem:[%s3 + $0x38] sm:$0xff]
      %v396 = vld [vmem:[%s3 + $0x40] sm:$0xff]
      %v397 = vld [vmem:[%s3 + $0x48] sm:$0xff]
      %v398 = vld [vmem:[%s3 + $0x50] sm:$0xff]
      %v399 = vld [vmem:[%s3 + $0x58] sm:$0xff]
      %v400 = vld [vmem:[%s3 + $0x60] sm:$0xff]
      %v401 = vld [vmem:[%s3 + $0x68] sm:$0xff]
      %v402 = vld [vmem:[%s3 + $0x70] sm:$0xff]
      %v403 = vld [vmem:[%s3 + $0x78] sm:$0xff]
      %v404 = vld [vmem:[%s3 + $0x80] sm:$0xff]
      %v405 = vld [vmem:[%s3 + $0x88] sm:$0xff]
      %v406 = vld [vmem:[%s3 + $0x90] sm:$0xff]
      %v407 = vld [vmem:[%s3 + $0x98] sm:$0xff]
      %v408 = vld [vmem:[%s3 + $0xa0] sm:$0xff]
      %v409 = vld [vmem:[%s3 + $0xa8] sm:$0xff]
      %v410 = vld [vmem:[%s3 + $0xb0] sm:$0xff]
      %v411 = vld [vmem:[%s3 + $0xb8] sm:$0xff]
      %v412 = vld [vmem:[%s3 + $0xc0] sm:$0xff]
      %v413 = vld [vmem:[%s3 + $0xc8] sm:$0xff]
      %v414 = vld [vmem:[%s3 + $0xd0] sm:$0xff]
      %v415 = vld [vmem:[%s3 + $0xd8] sm:$0xff]
      %v416 = vld [vmem:[%s3 + $0xe0] sm:$0xff]
      %v417 = vld [vmem:[%s3 + $0xe8] sm:$0xff]
      %v418 = vld [vmem:[%s3 + $0xf0] sm:$0xff]
      %v419 = vld [vmem:[%s3 + $0xf8] sm:$0xff]
      %v420 = vld [vmem:[%s3 + $0x100] sm:$0xff]
      %v421 = vld [vmem:[%s3 + $0x108] sm:$0xff]
      %v422 = vld [vmem:[%s3 + $0x110] sm:$0xff]
      %v423 = vld [vmem:[%s3 + $0x118] sm:$0xff]
      %v424 = vld [vmem:[%s3 + $0x120] sm:$0xff]
      %v425 = vld [vmem:[%s3 + $0x128] sm:$0xff]
      %v426 = vld [vmem:[%s3 + $0x130] sm:$0xff]
      %v427 = vld [vmem:[%s3 + $0x138] sm:$0xff]
      %v428 = vld [vmem:[%s3 + $0x140] sm:$0xff]
      %v429 = vld [vmem:[%s3 + $0x148] sm:$0xff]
      %v430 = vld [vmem:[%s3 + $0x150] sm:$0xff]
      %v431 = vld [vmem:[%s3 + $0x158] sm:$0xff]
      %v432 = vld [vmem:[%s3 + $0x160] sm:$0xff]
      %v433 = vld [vmem:[%s3 + $0x168] sm:$0xff]
      %v434 = vld [vmem:[%s3 + $0x170] sm:$0xff]
      %v435 = vld [vmem:[%s3 + $0x178] sm:$0xff]
      %v436 = vld [vmem:[%s3 + $0x180] sm:$0xff]
      %v437 = vld [vmem:[%s3 + $0x188] sm:$0xff]
      %v438 = vld [vmem:[%s3 + $0x190] sm:$0xff]
      %v439 = vld [vmem:[%s3 + $0x198] sm:$0xff]
      %v440 = vld [vmem:[%s3 + $0x1a0] sm:$0xff]
      %v441 = vld [vmem:[%s3 + $0x1a8] sm:$0xff]
      %v442 = vld [vmem:[%s3 + $0x1b0] sm:$0xff]
      %v443 = vld [vmem:[%s3 + $0x1b8] sm:$0xff]
      %v444 = vld [vmem:[%s3 + $0x1c0] sm:$0xff]
      %v445 = vld [vmem:[%s3 + $0x1c8] sm:$0xff]
      %v446 = vld [vmem:[%s3 + $0x1d0] sm:$0xff]
      %v447 = vld [vmem:[%s3 + $0x1d8] sm:$0xff]
      %v448 = vld [vmem:[%s3 + $0x1e0] sm:$0xff]
      %v449 = vld [vmem:[%s3 + $0x1e8] sm:$0xff]
      %v450 = vld [vmem:[%s3 + $0x1f0] sm:$0xff]
      %v451 = vld [vmem:[%s3 + $0x1f8] sm:$0xff]
      %v516 = vunpack.c.l.b16 %v388
      %v517 = vunpack.c.h.b16 %v388
      %v518 = vunpack.c.l.b16 %v389
      %v519 = vunpack.c.h.b16 %v389
      %v520 = vunpack.c.l.b16 %v390
      %v521 = vunpack.c.h.b16 %v390
      %v522 = vunpack.c.l.b16 %v391
      %v523 = vunpack.c.h.b16 %v391
      %v524 = vunpack.c.l.b16 %v392
      %v525 = vunpack.c.h.b16 %v392
      %v526 = vunpack.c.l.b16 %v393
      %v527 = vunpack.c.h.b16 %v393
      %v528 = vunpack.c.l.b16 %v394
      %v529 = vunpack.c.h.b16 %v394
      %v530 = vunpack.c.l.b16 %v395
      %v531 = vunpack.c.h.b16 %v395
      %v532 = vunpack.c.l.b16 %v396
      %v533 = vunpack.c.h.b16 %v396
      %v534 = vunpack.c.l.b16 %v397
      %v535 = vunpack.c.h.b16 %v397
      %v536 = vunpack.c.l.b16 %v398
      %v537 = vunpack.c.h.b16 %v398
      %v538 = vunpack.c.l.b16 %v399
      %v539 = vunpack.c.h.b16 %v399
      %v540 = vunpack.c.l.b16 %v400
      %v541 = vunpack.c.h.b16 %v400
      %v542 = vunpack.c.l.b16 %v401
      %v543 = vunpack.c.h.b16 %v401
      %v544 = vunpack.c.l.b16 %v402
      %v545 = vunpack.c.h.b16 %v402
      %v546 = vunpack.c.l.b16 %v403
      %v547 = vunpack.c.h.b16 %v403
      %v548 = vunpack.c.l.b16 %v404
      %v549 = vunpack.c.h.b16 %v404
      %v550 = vunpack.c.l.b16 %v405
      %v551 = vunpack.c.h.b16 %v405
      %v552 = vunpack.c.l.b16 %v406
      %v553 = vunpack.c.h.b16 %v406
      %v554 = vunpack.c.l.b16 %v407
      %v555 = vunpack.c.h.b16 %v407
      %v556 = vunpack.c.l.b16 %v408
      %v557 = vunpack.c.h.b16 %v408
      %v558 = vunpack.c.l.b16 %v409
      %v559 = vunpack.c.h.b16 %v409
      %v560 = vunpack.c.l.b16 %v410
      %v561 = vunpack.c.h.b16 %v410
      %v562 = vunpack.c.l.b16 %v411
      %v563 = vunpack.c.h.b16 %v411
      %v564 = vunpack.c.l.b16 %v412
      %v565 = vunpack.c.h.b16 %v412
      %v566 = vunpack.c.l.b16 %v413
      %v567 = vunpack.c.h.b16 %v413
      %v568 = vunpack.c.l.b16 %v414
      %v569 = vunpack.c.h.b16 %v414
      %v570 = vunpack.c.l.b16 %v415
      %v571 = vunpack.c.h.b16 %v415
      %v572 = vunpack.c.l.b16 %v416
      %v573 = vunpack.c.h.b16 %v416
      %v574 = vunpack.c.l.b16 %v417
      %v575 = vunpack.c.h.b16 %v417
      %v576 = vunpack.c.l.b16 %v418
      %v577 = vunpack.c.h.b16 %v418
      %v578 = vunpack.c.l.b16 %v419
      %v579 = vunpack.c.h.b16 %v419
      %v580 = vunpack.c.l.b16 %v420
      %v581 = vunpack.c.h.b16 %v420
      %v582 = vunpack.c.l.b16 %v421
      %v583 = vunpack.c.h.b16 %v421
      %v584 = vunpack.c.l.b16 %v422
      %v585 = vunpack.c.h.b16 %v422
      %v586 = vunpack.c.l.b16 %v423
      %v587 = vunpack.c.h.b16 %v423
      %v588 = vunpack.c.l.b16 %v424
      %v589 = vunpack.c.h.b16 %v424
      %v590 = vunpack.c.l.b16 %v425
      %v591 = vunpack.c.h.b16 %v425
      %v592 = vunpack.c.l.b16 %v426
      %v593 = vunpack.c.h.b16 %v426
      %v594 = vunpack.c.l.b16 %v427
      %v595 = vunpack.c.h.b16 %v427
      %v596 = vunpack.c.l.b16 %v428
      %v597 = vunpack.c.h.b16 %v428
      %v598 = vunpack.c.l.b16 %v429
      %v599 = vunpack.c.h.b16 %v429
      %v600 = vunpack.c.l.b16 %v430
      %v601 = vunpack.c.h.b16 %v430
      %v602 = vunpack.c.l.b16 %v431
      %v603 = vunpack.c.h.b16 %v431
      %v604 = vunpack.c.l.b16 %v432
      %v605 = vunpack.c.h.b16 %v432
      %v606 = vunpack.c.l.b16 %v433
      %v607 = vunpack.c.h.b16 %v433
      %v608 = vunpack.c.l.b16 %v434
      %v609 = vunpack.c.h.b16 %v434
      %v610 = vunpack.c.l.b16 %v435
      %v611 = vunpack.c.h.b16 %v435
      %v612 = vunpack.c.l.b16 %v436
      %v613 = vunpack.c.h.b16 %v436
      %v614 = vunpack.c.l.b16 %v437
      %v615 = vunpack.c.h.b16 %v437
      %v616 = vunpack.c.l.b16 %v438
      %v617 = vunpack.c.h.b16 %v438
      %v618 = vunpack.c.l.b16 %v439
      %v619 = vunpack.c.h.b16 %v439
      %v620 = vunpack.c.l.b16 %v440
      %v621 = vunpack.c.h.b16 %v440
      %v622 = vunpack.c.l.b16 %v441
      %v623 = vunpack.c.h.b16 %v441
      %v624 = vunpack.c.l.b16 %v442
      %v625 = vunpack.c.h.b16 %v442
      %v626 = vunpack.c.l.b16 %v443
      %v627 = vunpack.c.h.b16 %v443
      %v628 = vunpack.c.l.b16 %v444
      %v629 = vunpack.c.h.b16 %v444
      %v630 = vunpack.c.l.b16 %v445
      %v631 = vunpack.c.h.b16 %v445
      %v632 = vunpack.c.l.b16 %v446
      %v633 = vunpack.c.h.b16 %v446
      %v634 = vunpack.c.l.b16 %v447
      %v635 = vunpack.c.h.b16 %v447
      %v636 = vunpack.c.l.b16 %v448
      %v637 = vunpack.c.h.b16 %v448
      %v638 = vunpack.c.l.b16 %v449
      %v639 = vunpack.c.h.b16 %v449
      %v640 = vunpack.c.l.b16 %v450
      %v641 = vunpack.c.h.b16 %v450
      %v642 = vunpack.c.l.b16 %v451
      %v643 = vunpack.c.h.b16 %v451
      %v644 = vpack.c.b16 %v524, %v516
      %v645 = vpack.c.b16 %v525, %v517
      %v646 = vpack.c.b16 %v526, %v518
      %v647 = vpack.c.b16 %v527, %v519
      %v648 = vpack.c.b16 %v528, %v520
      %v649 = vpack.c.b16 %v529, %v521
      %v650 = vpack.c.b16 %v530, %v522
      %v651 = vpack.c.b16 %v531, %v523
      %v652 = vpack.c.b16 %v540, %v532
      %v653 = vpack.c.b16 %v541, %v533
      %v654 = vpack.c.b16 %v542, %v534
      %v655 = vpack.c.b16 %v543, %v535
      %v656 = vpack.c.b16 %v544, %v536
      %v657 = vpack.c.b16 %v545, %v537
      %v658 = vpack.c.b16 %v546, %v538
      %v659 = vpack.c.b16 %v547, %v539
      %v660 = vpack.c.b16 %v556, %v548
      %v661 = vpack.c.b16 %v557, %v549
      %v662 = vpack.c.b16 %v558, %v550
      %v663 = vpack.c.b16 %v559, %v551
      %v664 = vpack.c.b16 %v560, %v552
      %v665 = vpack.c.b16 %v561, %v553
      %v666 = vpack.c.b16 %v562, %v554
      %v667 = vpack.c.b16 %v563, %v555
      %v668 = vpack.c.b16 %v572, %v564
      %v669 = vpack.c.b16 %v573, %v565
      %v670 = vpack.c.b16 %v574, %v566
      %v671 = vpack.c.b16 %v575, %v567
      %v672 = vpack.c.b16 %v576, %v568
      %v673 = vpack.c.b16 %v577, %v569
      %v674 = vpack.c.b16 %v578, %v570
      %v675 = vpack.c.b16 %v579, %v571
      %v676 = vpack.c.b16 %v588, %v580
      %v677 = vpack.c.b16 %v589, %v581
      %v678 = vpack.c.b16 %v590, %v582
      %v679 = vpack.c.b16 %v591, %v583
      %v680 = vpack.c.b16 %v592, %v584
      %v681 = vpack.c.b16 %v593, %v585
      %v682 = vpack.c.b16 %v594, %v586
      %v683 = vpack.c.b16 %v595, %v587
      %v684 = vpack.c.b16 %v604, %v596
      %v685 = vpack.c.b16 %v605, %v597
      %v686 = vpack.c.b16 %v606, %v598
      %v687 = vpack.c.b16 %v607, %v599
      %v688 = vpack.c.b16 %v608, %v600
      %v689 = vpack.c.b16 %v609, %v601
      %v690 = vpack.c.b16 %v610, %v602
      %v691 = vpack.c.b16 %v611, %v603
      %v692 = vpack.c.b16 %v620, %v612
      %v693 = vpack.c.b16 %v621, %v613
      %v694 = vpack.c.b16 %v622, %v614
      %v695 = vpack.c.b16 %v623, %v615
      %v696 = vpack.c.b16 %v624, %v616
      %v697 = vpack.c.b16 %v625, %v617
      %v698 = vpack.c.b16 %v626, %v618
      %v699 = vpack.c.b16 %v627, %v619
      %v700 = vpack.c.b16 %v636, %v628
      %v701 = vpack.c.b16 %v637, %v629
      %v702 = vpack.c.b16 %v638, %v630
      %v703 = vpack.c.b16 %v639, %v631
      %v704 = vpack.c.b16 %v640, %v632
      %v705 = vpack.c.b16 %v641, %v633
      %v706 = vpack.c.b16 %v642, %v634
      %v707 = vpack.c.b16 %v643, %v635
      %772 = vmatprep.subr.bf16.mxu0 %v701
      %773 = vmatpush1.bf16.msra.mxu0 %v700
      %774 = vmatprep.subr.bf16.mxu0 %v693
      %775 = vmatpush1.bf16.msra.mxu0 %v692
      %776 = vmatprep.subr.bf16.mxu0 %v685
      %777 = vmatpush1.bf16.msra.mxu0 %v684
      %778 = vmatprep.subr.bf16.mxu0 %v677
      %779 = vmatpush1.bf16.msra.mxu0 %v676
      %780 = vmatprep.subr.bf16.mxu0 %v669
      %781 = vmatpush1.bf16.msra.mxu0 %v668
      %782 = vmatprep.subr.bf16.mxu0 %v661
      %783 = vmatpush1.bf16.msra.mxu0 %v660
      %784 = vmatprep.subr.bf16.mxu0 %v653
      %785 = vmatpush1.bf16.msra.mxu0 %v652
      %786 = vmatprep.subr.bf16.mxu0 %v645
      %787 = vmatpush1.bf16.msra.mxu0 %v644
      %788 = vmatprep.subr.bf16.mxu0 0
      %789 = vmatpush2.bf16.msra.mxu0 0
      %790 = vmatprep.subr.bf16.mxu0 0
      %791 = vmatpush2.bf16.msra.mxu0 0
      %792 = vmatprep.subr.bf16.mxu0 0
      %793 = vmatpush2.bf16.msra.mxu0 0
      %794 = vmatprep.subr.bf16.mxu0 0
      %795 = vmatpush2.bf16.msra.mxu0 0
      %796 = vmatprep.subr.bf16.mxu0 0
      %797 = vmatpush2.bf16.msra.mxu0 0
      %798 = vmatprep.subr.bf16.mxu0 0
      %799 = vmatpush2.bf16.msra.mxu0 0
      %800 = vmatprep.subr.bf16.mxu0 0
      %801 = vmatpush2.bf16.msra.mxu0 0
      %802 = vmatprep.subr.bf16.mxu0 0
      %803 = vmatpush2.bf16.msra.mxu0 0
      %804 = vmatprep.mubr.bf16.mxu0 0
      %805 = vmatmul.mubr.bf16.gmra.mxu0 %v386
      %v806 = vpop.f32.mrf.mxu0
      %v807 = vadd.f32 0.0, %v806
      %v808 = vpop.f32.mrf.mxu0
      %v809 = vadd.f32 0.0, %v808
      %v810 = vpop.f32.mrf.mxu0
      %v811 = vadd.f32 0.0, %v810
      %v812 = vpop.f32.mrf.mxu0
      %v813 = vadd.f32 0.0, %v812
      %814 = vmatprep.mubr.bf16.mxu0 0
      %815 = vmatmul.mubr.bf16.gmra.mxu0 %v387
      %v816 = vpop.f32.mrf.mxu0
      %v817 = vadd.f32 0.0, %v816
      %v818 = vpop.f32.mrf.mxu0
      %v819 = vadd.f32 0.0, %v818
      %v820 = vpop.f32.mrf.mxu0
      %v821 = vpop.f32.mrf.mxu0
      %822 = vdwg.mxu0
      %823 = vmatprep.subr.bf16.mxu0 %v703
      %824 = vmatpush1.bf16.msra.mxu0 %v702
      %825 = vmatprep.subr.bf16.mxu0 %v695
      %826 = vmatpush1.bf16.msra.mxu0 %v694
      %827 = vmatprep.subr.bf16.mxu0 %v687
      %828 = vmatpush1.bf16.msra.mxu0 %v686
      %829 = vmatprep.subr.bf16.mxu0 %v679
      %830 = vmatpush1.bf16.msra.mxu0 %v678
      %831 = vmatprep.subr.bf16.mxu0 %v671
      %832 = vmatpush1.bf16.msra.mxu0 %v670
      %833 = vmatprep.subr.bf16.mxu0 %v663
      %834 = vmatpush1.bf16.msra.mxu0 %v662
      %835 = vmatprep.subr.bf16.mxu0 %v655
      %836 = vmatpush1.bf16.msra.mxu0 %v654
      %837 = vmatprep.subr.bf16.mxu0 %v647
      %838 = vmatpush1.bf16.msra.mxu0 %v646
      %839 = vmatprep.subr.bf16.mxu0 0
      %840 = vmatpush2.bf16.msra.mxu0 0
      %841 = vmatprep.subr.bf16.mxu0 0
      %842 = vmatpush2.bf16.msra.mxu0 0
      %843 = vmatprep.subr.bf16.mxu0 0
      %844 = vmatpush2.bf16.msra.mxu0 0
      %845 = vmatprep.subr.bf16.mxu0 0
      %846 = vmatpush2.bf16.msra.mxu0 0
      %847 = vmatprep.subr.bf16.mxu0 0
      %848 = vmatpush2.bf16.msra.mxu0 0
      %849 = vmatprep.subr.bf16.mxu0 0
      %850 = vmatpush2.bf16.msra.mxu0 0
      %851 = vmatprep.subr.bf16.mxu0 0
      %852 = vmatpush2.bf16.msra.mxu0 0
      %853 = vmatprep.subr.bf16.mxu0 0
      %854 = vmatpush2.bf16.msra.mxu0 0
      %855 = vmatprep.mubr.bf16.mxu0 0
      %856 = vmatmul.mubr.bf16.gmra.mxu0 %v386
      %v857 = vpop.f32.mrf.mxu0
      %v858 = vadd.f32 0.0, %v857
      %v859 = vpop.f32.mrf.mxu0
      %v860 = vadd.f32 0.0, %v859
      %v861 = vpop.f32.mrf.mxu0
      %v862 = vadd.f32 0.0, %v861
      %v863 = vpop.f32.mrf.mxu0
      %v864 = vadd.f32 0.0, %v863
      %865 = vmatprep.mubr.bf16.mxu0 0
      %866 = vmatmul.mubr.bf16.gmra.mxu0 %v387
      %v867 = vpop.f32.mrf.mxu0
      %v868 = vadd.f32 0.0, %v867
      %v869 = vpop.f32.mrf.mxu0
      %v870 = vadd.f32 0.0, %v869
      %v871 = vpop.f32.mrf.mxu0
      %v872 = vpop.f32.mrf.mxu0
      %873 = vdwg.mxu0
      %874 = vmatprep.subr.bf16.mxu0 %v705
      %875 = vmatpush1.bf16.msra.mxu0 %v704
      %876 = vmatprep.subr.bf16.mxu0 %v697
      %877 = vmatpush1.bf16.msra.mxu0 %v696
      %878 = vmatprep.subr.bf16.mxu0 %v689
      %879 = vmatpush1.bf16.msra.mxu0 %v688
      %880 = vmatprep.subr.bf16.mxu0 %v681
      %881 = vmatpush1.bf16.msra.mxu0 %v680
      %882 = vmatprep.subr.bf16.mxu0 %v673
      %883 = vmatpush1.bf16.msra.mxu0 %v672
      %884 = vmatprep.subr.bf16.mxu0 %v665
      %885 = vmatpush1.bf16.msra.mxu0 %v664
      %886 = vmatprep.subr.bf16.mxu0 %v657
      %887 = vmatpush1.bf16.msra.mxu0 %v656
      %888 = vmatprep.subr.bf16.mxu0 %v649
      %889 = vmatpush1.bf16.msra.mxu0 %v648
      %890 = vmatprep.subr.bf16.mxu0 0
      %891 = vmatpush2.bf16.msra.mxu0 0
      %892 = vmatprep.subr.bf16.mxu0 0
      %893 = vmatpush2.bf16.msra.mxu0 0
      %894 = vmatprep.subr.bf16.mxu0 0
      %895 = vmatpush2.bf16.msra.mxu0 0
      %896 = vmatprep.subr.bf16.mxu0 0
      %897 = vmatpush2.bf16.msra.mxu0 0
      %898 = vmatprep.subr.bf16.mxu0 0
      %899 = vmatpush2.bf16.msra.mxu0 0
      %900 = vmatprep.subr.bf16.mxu0 0
      %901 = vmatpush2.bf16.msra.mxu0 0
      %902 = vmatprep.subr.bf16.mxu0 0
      %903 = vmatpush2.bf16.msra.mxu0 0
      %904 = vmatprep.subr.bf16.mxu0 0
      %905 = vmatpush2.bf16.msra.mxu0 0
      %906 = vmatprep.mubr.bf16.mxu0 0
      %907 = vmatmul.mubr.bf16.gmra.mxu0 %v386
      %v908 = vpop.f32.mrf.mxu0
      %v909 = vadd.f32 0.0, %v908
      %v910 = vpop.f32.mrf.mxu0
      %v911 = vadd.f32 0.0, %v910
      %v912 = vpop.f32.mrf.mxu0
      %v913 = vadd.f32 0.0, %v912
      %v914 = vpop.f32.mrf.mxu0
      %v915 = vadd.f32 0.0, %v914
      %916 = vmatprep.mubr.bf16.mxu0 0
      %917 = vmatmul.mubr.bf16.gmra.mxu0 %v387
      %v918 = vpop.f32.mrf.mxu0
      %v919 = vadd.f32 0.0, %v918
      %v920 = vpop.f32.mrf.mxu0
      %v921 = vadd.f32 0.0, %v920
      %v922 = vpop.f32.mrf.mxu0
      %v923 = vpop.f32.mrf.mxu0
      %924 = vdwg.mxu0
      %925 = vmatprep.subr.bf16.mxu0 %v707
      %926 = vmatpush1.bf16.msra.mxu0 %v706
      %927 = vmatprep.subr.bf16.mxu0 %v699
      %928 = vmatpush1.bf16.msra.mxu0 %v698
      %929 = vmatprep.subr.bf16.mxu0 %v691
      %930 = vmatpush1.bf16.msra.mxu0 %v690
      %931 = vmatprep.subr.bf16.mxu0 %v683
      %932 = vmatpush1.bf16.msra.mxu0 %v682
      %933 = vmatprep.subr.bf16.mxu0 %v675
      %934 = vmatpush1.bf16.msra.mxu0 %v674
      %935 = vmatprep.subr.bf16.mxu0 %v667
      %936 = vmatpush1.bf16.msra.mxu0 %v666
      %937 = vmatprep.subr.bf16.mxu0 %v659
      %938 = vmatpush1.bf16.msra.mxu0 %v658
      %939 = vmatprep.subr.bf16.mxu0 %v651
      %940 = vmatpush1.bf16.msra.mxu0 %v650
      %941 = vmatprep.subr.bf16.mxu0 0
      %942 = vmatpush2.bf16.msra.mxu0 0
      %943 = vmatprep.subr.bf16.mxu0 0
      %944 = vmatpush2.bf16.msra.mxu0 0
      %945 = vmatprep.subr.bf16.mxu0 0
      %946 = vmatpush2.bf16.msra.mxu0 0
      %947 = vmatprep.subr.bf16.mxu0 0
      %948 = vmatpush2.bf16.msra.mxu0 0
      %949 = vmatprep.subr.bf16.mxu0 0
      %950 = vmatpush2.bf16.msra.mxu0 0
      %951 = vmatprep.subr.bf16.mxu0 0
      %952 = vmatpush2.bf16.msra.mxu0 0
      %953 = vmatprep.subr.bf16.mxu0 0
      %954 = vmatpush2.bf16.msra.mxu0 0
      %955 = vmatprep.subr.bf16.mxu0 0
      %956 = vmatpush2.bf16.msra.mxu0 0
      %957 = vmatprep.mubr.bf16.mxu0 0
      %958 = vmatmul.mubr.bf16.gmra.mxu0 %v386
      %v959 = vpop.f32.mrf.mxu0
      %v960 = vadd.f32 0.0, %v959
      %v961 = vpop.f32.mrf.mxu0
      %v962 = vadd.f32 0.0, %v961
      %v963 = vpop.f32.mrf.mxu0
      %v964 = vadd.f32 0.0, %v963
      %v965 = vpop.f32.mrf.mxu0
      %v966 = vadd.f32 0.0, %v965
      %967 = vmatprep.mubr.bf16.mxu0 0
      %968 = vmatmul.mubr.bf16.gmra.mxu0 %v387
      %v969 = vpop.f32.mrf.mxu0
      %v970 = vadd.f32 0.0, %v969
      %v971 = vpop.f32.mrf.mxu0
      %v972 = vadd.f32 0.0, %v971
      %v973 = vpop.f32.mrf.mxu0
      %v974 = vpop.f32.mrf.mxu0
      %975 = vdwg.mxu0
      %s976 = smul.u32 %s24, 24
      %v977 = vlaneseq
      %v978 = vshrl.u32 %v977, 7
      %v979 = vadd.s32 %v978, 8
      %v980 = vadd.s32 %v978, 16
      %v981 = vstv %s976
      %v982 = vadd.s32 %v981, %v978
      %v983 = vadd.s32 %v981, %v979
      %v984 = vadd.s32 %v981, %v980
      %vm985 = vcmp.lt.s32.totalorder %v982, 20
      %vm986 = vcmp.lt.s32.totalorder %v983, 20
      %vm987 = vcmp.lt.s32.totalorder %v984, 20
      %v988 = vsel %vm985, 1, 0
      %v989 = vsel %vm986, 1, 0
      %v990 = vsel %vm987, 1, 0
      %vm991 = vcmp.eq.s32.totalorder %v988, 1
      %vm992 = vcmp.eq.s32.totalorder %v989, 1
      %vm993 = vcmp.eq.s32.totalorder %v990, 1
      %v994 = vsel %vm991, %v807, 0.0
      %v995 = vsel %vm991, %v809, 0.0
      %v996 = vsel %vm991, %v858, 0.0
      %v997 = vsel %vm991, %v860, 0.0
      %v998 = vsel %vm991, %v909, 0.0
      %v999 = vsel %vm991, %v911, 0.0
      %v1000 = vsel %vm991, %v960, 0.0
      %v1001 = vsel %vm991, %v962, 0.0
      %v1002 = vsel %vm992, %v811, 0.0
      %v1003 = vsel %vm992, %v813, 0.0
      %v1004 = vsel %vm992, %v862, 0.0
      %v1005 = vsel %vm992, %v864, 0.0
      %v1006 = vsel %vm992, %v913, 0.0
      %v1007 = vsel %vm992, %v915, 0.0
      %v1008 = vsel %vm992, %v964, 0.0
      %v1009 = vsel %vm992, %v966, 0.0
      %v1010 = vsel %vm993, %v817, 0.0
      %v1011 = vsel %vm993, %v819, 0.0
      %v1012 = vsel %vm993, %v868, 0.0
      %v1013 = vsel %vm993, %v870, 0.0
      %v1014 = vsel %vm993, %v919, 0.0
      %v1015 = vsel %vm993, %v921, 0.0
      %v1016 = vsel %vm993, %v970, 0.0
      %v1017 = vsel %vm993, %v972, 0.0
      %v1018 = vadd.f32 %v994, %v1002
      %v1019 = vadd.f32 %v1018, %v1010
      %v1020 = vrot.slane %v1019, 4
      %v1021 = vadd.f32 %v1019, %v1020
      %v1022 = vrot.slane %v1021, 2
      %v1023 = vadd.f32 %v1021, %v1022
      %v1024 = vrot.slane %v1023, 1
      %v1025 = vadd.f32 %v1023, %v1024
      %v1026 = vadd.f32 %v995, %v1003
      %v1027 = vadd.f32 %v1026, %v1011
      %v1028 = vrot.slane %v1027, 4
      %v1029 = vadd.f32 %v1027, %v1028
      %v1030 = vrot.slane %v1029, 2
      %v1031 = vadd.f32 %v1029, %v1030
      %v1032 = vrot.slane %v1031, 1
      %v1033 = vadd.f32 %v1031, %v1032
      %v1034 = vadd.f32 %v996, %v1004
      %v1035 = vadd.f32 %v1034, %v1012
      %v1036 = vrot.slane %v1035, 4
      %v1037 = vadd.f32 %v1035, %v1036
      %v1038 = vrot.slane %v1037, 2
      %v1039 = vadd.f32 %v1037, %v1038
      %v1040 = vrot.slane %v1039, 1
      %v1041 = vadd.f32 %v1039, %v1040
      %v1042 = vadd.f32 %v997, %v1005
      %v1043 = vadd.f32 %v1042, %v1013
      %v1044 = vrot.slane %v1043, 4
      %v1045 = vadd.f32 %v1043, %v1044
      %v1046 = vrot.slane %v1045, 2
      %v1047 = vadd.f32 %v1045, %v1046
      %v1048 = vrot.slane %v1047, 1
      %v1049 = vadd.f32 %v1047, %v1048
      %v1050 = vadd.f32 %v998, %v1006
      %v1051 = vadd.f32 %v1050, %v1014
      %v1052 = vrot.slane %v1051, 4
      %v1053 = vadd.f32 %v1051, %v1052
      %v1054 = vrot.slane %v1053, 2
      %v1055 = vadd.f32 %v1053, %v1054
      %v1056 = vrot.slane %v1055, 1
      %v1057 = vadd.f32 %v1055, %v1056
      %v1058 = vadd.f32 %v999, %v1007
      %v1059 = vadd.f32 %v1058, %v1015
      %v1060 = vrot.slane %v1059, 4
      %v1061 = vadd.f32 %v1059, %v1060
      %v1062 = vrot.slane %v1061, 2
      %v1063 = vadd.f32 %v1061, %v1062
      %v1064 = vrot.slane %v1063, 1
      %v1065 = vadd.f32 %v1063, %v1064
      %v1066 = vadd.f32 %v1000, %v1008
      %v1067 = vadd.f32 %v1066, %v1016
      %v1068 = vrot.slane %v1067, 4
      %v1069 = vadd.f32 %v1067, %v1068
      %v1070 = vrot.slane %v1069, 2
      %v1071 = vadd.f32 %v1069, %v1070
      %v1072 = vrot.slane %v1071, 1
      %v1073 = vadd.f32 %v1071, %v1072
      %v1074 = vadd.f32 %v1001, %v1009
      %v1075 = vadd.f32 %v1074, %v1017
      %v1076 = vrot.slane %v1075, 4
      %v1077 = vadd.f32 %v1075, %v1076
      %v1078 = vrot.slane %v1077, 2
      %v1079 = vadd.f32 %v1077, %v1078
      %v1080 = vrot.slane %v1079, 1
      %v1081 = vadd.f32 %v1079, %v1080
      %v1082 = vmul.f32 %v994, %v994
      %v1083 = vmul.f32 %v995, %v995
      %v1084 = vmul.f32 %v996, %v996
      %v1085 = vmul.f32 %v997, %v997
      %v1086 = vmul.f32 %v998, %v998
      %v1087 = vmul.f32 %v999, %v999
      %v1088 = vmul.f32 %v1000, %v1000
      %v1089 = vmul.f32 %v1001, %v1001
      %v1090 = vmul.f32 %v1002, %v1002
      %v1091 = vmul.f32 %v1003, %v1003
      %v1092 = vmul.f32 %v1004, %v1004
      %v1093 = vmul.f32 %v1005, %v1005
      %v1094 = vmul.f32 %v1006, %v1006
      %v1095 = vmul.f32 %v1007, %v1007
      %v1096 = vmul.f32 %v1008, %v1008
      %v1097 = vmul.f32 %v1009, %v1009
      %v1098 = vmul.f32 %v1010, %v1010
      %v1099 = vmul.f32 %v1011, %v1011
      %v1100 = vmul.f32 %v1012, %v1012
      %v1101 = vmul.f32 %v1013, %v1013
      %v1102 = vmul.f32 %v1014, %v1014
      %v1103 = vmul.f32 %v1015, %v1015
      %v1104 = vmul.f32 %v1016, %v1016
      %v1105 = vmul.f32 %v1017, %v1017
      %v1106 = vadd.f32 %v1082, %v1090
      %v1107 = vadd.f32 %v1106, %v1098
      %v1108 = vrot.slane %v1107, 4
      %v1109 = vadd.f32 %v1107, %v1108
      %v1110 = vrot.slane %v1109, 2
      %v1111 = vadd.f32 %v1109, %v1110
      %v1112 = vrot.slane %v1111, 1
      %v1113 = vadd.f32 %v1111, %v1112
      %v1114 = vadd.f32 %v1083, %v1091
      %v1115 = vadd.f32 %v1114, %v1099
      %v1116 = vrot.slane %v1115, 4
      %v1117 = vadd.f32 %v1115, %v1116
      %v1118 = vrot.slane %v1117, 2
      %v1119 = vadd.f32 %v1117, %v1118
      %v1120 = vrot.slane %v1119, 1
      %v1121 = vadd.f32 %v1119, %v1120
      %v1122 = vadd.f32 %v1084, %v1092
      %v1123 = vadd.f32 %v1122, %v1100
      %v1124 = vrot.slane %v1123, 4
      %v1125 = vadd.f32 %v1123, %v1124
      %v1126 = vrot.slane %v1125, 2
      %v1127 = vadd.f32 %v1125, %v1126
      %v1128 = vrot.slane %v1127, 1
      %v1129 = vadd.f32 %v1127, %v1128
      %v1130 = vadd.f32 %v1085, %v1093
      %v1131 = vadd.f32 %v1130, %v1101
      %v1132 = vrot.slane %v1131, 4
      %v1133 = vadd.f32 %v1131, %v1132
      %v1134 = vrot.slane %v1133, 2
      %v1135 = vadd.f32 %v1133, %v1134
      %v1136 = vrot.slane %v1135, 1
      %v1137 = vadd.f32 %v1135, %v1136
      %v1138 = vadd.f32 %v1086, %v1094
      %v1139 = vadd.f32 %v1138, %v1102
      %v1140 = vrot.slane %v1139, 4
      %v1141 = vadd.f32 %v1139, %v1140
      %v1142 = vrot.slane %v1141, 2
      %v1143 = vadd.f32 %v1141, %v1142
      %v1144 = vrot.slane %v1143, 1
      %v1145 = vadd.f32 %v1143, %v1144
      %v1146 = vadd.f32 %v1087, %v1095
      %v1147 = vadd.f32 %v1146, %v1103
      %v1148 = vrot.slane %v1147, 4
      %v1149 = vadd.f32 %v1147, %v1148
      %v1150 = vrot.slane %v1149, 2
      %v1151 = vadd.f32 %v1149, %v1150
      %v1152 = vrot.slane %v1151, 1
      %v1153 = vadd.f32 %v1151, %v1152
      %v1154 = vadd.f32 %v1088, %v1096
      %v1155 = vadd.f32 %v1154, %v1104
      %v1156 = vrot.slane %v1155, 4
      %v1157 = vadd.f32 %v1155, %v1156
      %v1158 = vrot.slane %v1157, 2
      %v1159 = vadd.f32 %v1157, %v1158
      %v1160 = vrot.slane %v1159, 1
      %v1161 = vadd.f32 %v1159, %v1160
      %v1162 = vadd.f32 %v1089, %v1097
      %v1163 = vadd.f32 %v1162, %v1105
      %v1164 = vrot.slane %v1163, 4
      %v1165 = vadd.f32 %v1163, %v1164
      %v1166 = vrot.slane %v1165, 2
      %v1167 = vadd.f32 %v1165, %v1166
      %v1168 = vrot.slane %v1167, 1
      %v1169 = vadd.f32 %v1167, %v1168
      %v1178 = vcombine.low %v1025, %v1033
      %v1179 = vcombine.low %v1041, %v1049
      %v1180 = vcombine.low %v1057, %v1065
      %v1181 = vcombine.low %v1073, %v1081
      %v1183 = vunpack.c.l.s4 1966171168
      %v1184 = vunpack.c.0.s8 %v1183
      %v1185 = vlaneseq
      %v1186 = vshrl.u32 %v1185, 7
      %v1187 = vsub.s32 %v1184, %v1186
      %v1188 = vrot.slane %v1178, %v1187
      %v1190 = vunpack.c.l.s4 1966171168
      %v1191 = vunpack.c.0.s8 %v1190
      %v1192 = vlaneseq
      %v1193 = vshrl.u32 %v1192, 7
      %v1194 = vsub.s32 %v1191, %v1193
      %v1195 = vrot.slane %v1179, %v1194
      %v1197 = vunpack.c.l.s4 1966171168
      %v1198 = vunpack.c.0.s8 %v1197
      %v1199 = vlaneseq
      %v1200 = vshrl.u32 %v1199, 7
      %v1201 = vsub.s32 %v1198, %v1200
      %v1202 = vrot.slane %v1180, %v1201
      %v1204 = vunpack.c.l.s4 1966171168
      %v1205 = vunpack.c.0.s8 %v1204
      %v1206 = vlaneseq
      %v1207 = vshrl.u32 %v1206, 7
      %v1208 = vsub.s32 %v1205, %v1207
      %v1209 = vrot.slane %v1181, %v1208
      %v1210 = vcombine.low %v1188, %v1195
      %v1211 = vcombine.low %v1202, %v1209
      %v1213 = vunpack.c.l.s4 1966171168
      %v1214 = vunpack.c.0.s8 %v1213
      %v1215 = vlaneseq
      %v1216 = vshrl.u32 %v1215, 7
      %v1217 = vsub.s32 %v1214, %v1216
      %v1218 = vrot.slane %v1210, %v1217
      %v1220 = vunpack.c.l.s4 1966171168
      %v1221 = vunpack.c.0.s8 %v1220
      %v1222 = vlaneseq
      %v1223 = vshrl.u32 %v1222, 7
      %v1224 = vsub.s32 %v1221, %v1223
      %v1225 = vrot.slane %v1211, %v1224
      %v1226 = vcombine.low %v1218, %v1225
      %1228 = vst [vmem:[%s336] sm:$0xff] %v1226
      %v1237 = vcombine.low %v1113, %v1121
      %v1238 = vcombine.low %v1129, %v1137
      %v1239 = vcombine.low %v1145, %v1153
      %v1240 = vcombine.low %v1161, %v1169
      %v1242 = vunpack.c.l.s4 1966171168
      %v1243 = vunpack.c.0.s8 %v1242
      %v1244 = vlaneseq
      %v1245 = vshrl.u32 %v1244, 7
      %v1246 = vsub.s32 %v1243, %v1245
      %v1247 = vrot.slane %v1237, %v1246
      %v1249 = vunpack.c.l.s4 1966171168
      %v1250 = vunpack.c.0.s8 %v1249
      %v1251 = vlaneseq
      %v1252 = vshrl.u32 %v1251, 7
      %v1253 = vsub.s32 %v1250, %v1252
      %v1254 = vrot.slane %v1238, %v1253
      %v1256 = vunpack.c.l.s4 1966171168
      %v1257 = vunpack.c.0.s8 %v1256
      %v1258 = vlaneseq
      %v1259 = vshrl.u32 %v1258, 7
      %v1260 = vsub.s32 %v1257, %v1259
      %v1261 = vrot.slane %v1239, %v1260
      %v1263 = vunpack.c.l.s4 1966171168
      %v1264 = vunpack.c.0.s8 %v1263
      %v1265 = vlaneseq
      %v1266 = vshrl.u32 %v1265, 7
      %v1267 = vsub.s32 %v1264, %v1266
      %v1268 = vrot.slane %v1240, %v1267
      %v1269 = vcombine.low %v1247, %v1254
      %v1270 = vcombine.low %v1261, %v1268
      %v1272 = vunpack.c.l.s4 1966171168
      %v1273 = vunpack.c.0.s8 %v1272
      %v1274 = vlaneseq
      %v1275 = vshrl.u32 %v1274, 7
      %v1276 = vsub.s32 %v1273, %v1275
      %v1277 = vrot.slane %v1269, %v1276
      %v1279 = vunpack.c.l.s4 1966171168
      %v1280 = vunpack.c.0.s8 %v1279
      %v1281 = vlaneseq
      %v1282 = vshrl.u32 %v1281, 7
      %v1283 = vsub.s32 %v1280, %v1282
      %v1284 = vrot.slane %v1270, %v1283
      %v1285 = vcombine.low %v1277, %v1284
      %1287 = vst [vmem:[%s342] sm:$0xff] %v1285
      %v1288 = vsel %vm991, %v807, -inf
      %v1289 = vsel %vm991, %v809, -inf
      %v1290 = vsel %vm991, %v858, -inf
      %v1291 = vsel %vm991, %v860, -inf
      %v1292 = vsel %vm991, %v909, -inf
      %v1293 = vsel %vm991, %v911, -inf
      %v1294 = vsel %vm991, %v960, -inf
      %v1295 = vsel %vm991, %v962, -inf
      %v1296 = vsel %vm992, %v811, -inf
      %v1297 = vsel %vm992, %v813, -inf
      %v1298 = vsel %vm992, %v862, -inf
      %v1299 = vsel %vm992, %v864, -inf
      %v1300 = vsel %vm992, %v913, -inf
      %v1301 = vsel %vm992, %v915, -inf
      %v1302 = vsel %vm992, %v964, -inf
      %v1303 = vsel %vm992, %v966, -inf
      %v1304 = vsel %vm993, %v817, -inf
      %v1305 = vsel %vm993, %v819, -inf
      %v1306 = vsel %vm993, %v868, -inf
      %v1307 = vsel %vm993, %v870, -inf
      %v1308 = vsel %vm993, %v919, -inf
      %v1309 = vsel %vm993, %v921, -inf
      %v1310 = vsel %vm993, %v970, -inf
      %v1311 = vsel %vm993, %v972, -inf
      %v1312 = vsel %vm991, %v807, inf
      %v1313 = vsel %vm991, %v809, inf
      %v1314 = vsel %vm991, %v858, inf
      %v1315 = vsel %vm991, %v860, inf
      %v1316 = vsel %vm991, %v909, inf
      %v1317 = vsel %vm991, %v911, inf
      %v1318 = vsel %vm991, %v960, inf
      %v1319 = vsel %vm991, %v962, inf
      %v1320 = vsel %vm992, %v811, inf
      %v1321 = vsel %vm992, %v813, inf
      %v1322 = vsel %vm992, %v862, inf
      %v1323 = vsel %vm992, %v864, inf
      %v1324 = vsel %vm992, %v913, inf
      %v1325 = vsel %vm992, %v915, inf
      %v1326 = vsel %vm992, %v964, inf
      %v1327 = vsel %vm992, %v966, inf
      %v1328 = vsel %vm993, %v817, inf
      %v1329 = vsel %vm993, %v819, inf
      %v1330 = vsel %vm993, %v868, inf
      %v1331 = vsel %vm993, %v870, inf
      %v1332 = vsel %vm993, %v919, inf
      %v1333 = vsel %vm993, %v921, inf
      %v1334 = vsel %vm993, %v970, inf
      %v1335 = vsel %vm993, %v972, inf
      %v1336 = vmax.f32 %v1288, %v1296
      %v1337 = vmax.f32 %v1336, %v1304
      %v1338 = vrot.slane %v1337, 4
      %v1339 = vmax.f32 %v1337, %v1338
      %v1340 = vrot.slane %v1339, 2
      %v1341 = vmax.f32 %v1339, %v1340
      %v1342 = vrot.slane %v1341, 1
      %v1343 = vmax.f32 %v1341, %v1342
      %v1344 = vmax.f32 %v1289, %v1297
      %v1345 = vmax.f32 %v1344, %v1305
      %v1346 = vrot.slane %v1345, 4
      %v1347 = vmax.f32 %v1345, %v1346
      %v1348 = vrot.slane %v1347, 2
      %v1349 = vmax.f32 %v1347, %v1348
      %v1350 = vrot.slane %v1349, 1
      %v1351 = vmax.f32 %v1349, %v1350
      %v1352 = vmax.f32 %v1290, %v1298
      %v1353 = vmax.f32 %v1352, %v1306
      %v1354 = vrot.slane %v1353, 4
      %v1355 = vmax.f32 %v1353, %v1354
      %v1356 = vrot.slane %v1355, 2
      %v1357 = vmax.f32 %v1355, %v1356
      %v1358 = vrot.slane %v1357, 1
      %v1359 = vmax.f32 %v1357, %v1358
      %v1360 = vmax.f32 %v1291, %v1299
      %v1361 = vmax.f32 %v1360, %v1307
      %v1362 = vrot.slane %v1361, 4
      %v1363 = vmax.f32 %v1361, %v1362
      %v1364 = vrot.slane %v1363, 2
      %v1365 = vmax.f32 %v1363, %v1364
      %v1366 = vrot.slane %v1365, 1
      %v1367 = vmax.f32 %v1365, %v1366
      %v1368 = vmax.f32 %v1292, %v1300
      %v1369 = vmax.f32 %v1368, %v1308
      %v1370 = vrot.slane %v1369, 4
      %v1371 = vmax.f32 %v1369, %v1370
      %v1372 = vrot.slane %v1371, 2
      %v1373 = vmax.f32 %v1371, %v1372
      %v1374 = vrot.slane %v1373, 1
      %v1375 = vmax.f32 %v1373, %v1374
      %v1376 = vmax.f32 %v1293, %v1301
      %v1377 = vmax.f32 %v1376, %v1309
      %v1378 = vrot.slane %v1377, 4
      %v1379 = vmax.f32 %v1377, %v1378
      %v1380 = vrot.slane %v1379, 2
      %v1381 = vmax.f32 %v1379, %v1380
      %v1382 = vrot.slane %v1381, 1
      %v1383 = vmax.f32 %v1381, %v1382
      %v1384 = vmax.f32 %v1294, %v1302
      %v1385 = vmax.f32 %v1384, %v1310
      %v1386 = vrot.slane %v1385, 4
      %v1387 = vmax.f32 %v1385, %v1386
      %v1388 = vrot.slane %v1387, 2
      %v1389 = vmax.f32 %v1387, %v1388
      %v1390 = vrot.slane %v1389, 1
      %v1391 = vmax.f32 %v1389, %v1390
      %v1392 = vmax.f32 %v1295, %v1303
      %v1393 = vmax.f32 %v1392, %v1311
      %v1394 = vrot.slane %v1393, 4
      %v1395 = vmax.f32 %v1393, %v1394
      %v1396 = vrot.slane %v1395, 2
      %v1397 = vmax.f32 %v1395, %v1396
      %v1398 = vrot.slane %v1397, 1
      %v1399 = vmax.f32 %v1397, %v1398
      %v1408 = vcombine.low %v1343, %v1351
      %v1409 = vcombine.low %v1359, %v1367
      %v1410 = vcombine.low %v1375, %v1383
      %v1411 = vcombine.low %v1391, %v1399
      %v1413 = vunpack.c.l.s4 1966171168
      %v1414 = vunpack.c.0.s8 %v1413
      %v1415 = vlaneseq
      %v1416 = vshrl.u32 %v1415, 7
      %v1417 = vsub.s32 %v1414, %v1416
      %v1418 = vrot.slane %v1408, %v1417
      %v1420 = vunpack.c.l.s4 1966171168
      %v1421 = vunpack.c.0.s8 %v1420
      %v1422 = vlaneseq
      %v1423 = vshrl.u32 %v1422, 7
      %v1424 = vsub.s32 %v1421, %v1423
      %v1425 = vrot.slane %v1409, %v1424
      %v1427 = vunpack.c.l.s4 1966171168
      %v1428 = vunpack.c.0.s8 %v1427
      %v1429 = vlaneseq
      %v1430 = vshrl.u32 %v1429, 7
      %v1431 = vsub.s32 %v1428, %v1430
      %v1432 = vrot.slane %v1410, %v1431
      %v1434 = vunpack.c.l.s4 1966171168
      %v1435 = vunpack.c.0.s8 %v1434
      %v1436 = vlaneseq
      %v1437 = vshrl.u32 %v1436, 7
      %v1438 = vsub.s32 %v1435, %v1437
      %v1439 = vrot.slane %v1411, %v1438
      %v1440 = vcombine.low %v1418, %v1425
      %v1441 = vcombine.low %v1432, %v1439
      %v1443 = vunpack.c.l.s4 1966171168
      %v1444 = vunpack.c.0.s8 %v1443
      %v1445 = vlaneseq
      %v1446 = vshrl.u32 %v1445, 7
      %v1447 = vsub.s32 %v1444, %v1446
      %v1448 = vrot.slane %v1440, %v1447
      %v1450 = vunpack.c.l.s4 1966171168
      %v1451 = vunpack.c.0.s8 %v1450
      %v1452 = vlaneseq
      %v1453 = vshrl.u32 %v1452, 7
      %v1454 = vsub.s32 %v1451, %v1453
      %v1455 = vrot.slane %v1441, %v1454
      %v1456 = vcombine.low %v1448, %v1455
      %1458 = vst [vmem:[%s348] sm:$0xff] %v1456
      %v1459 = vmin.f32 %v1312, %v1320
      %v1460 = vmin.f32 %v1459, %v1328
      %v1461 = vrot.slane %v1460, 4
      %v1462 = vmin.f32 %v1460, %v1461
      %v1463 = vrot.slane %v1462, 2
      %v1464 = vmin.f32 %v1462, %v1463
      %v1465 = vrot.slane %v1464, 1
      %v1466 = vmin.f32 %v1464, %v1465
      %v1467 = vmin.f32 %v1313, %v1321
      %v1468 = vmin.f32 %v1467, %v1329
      %v1469 = vrot.slane %v1468, 4
      %v1470 = vmin.f32 %v1468, %v1469
      %v1471 = vrot.slane %v1470, 2
      %v1472 = vmin.f32 %v1470, %v1471
      %v1473 = vrot.slane %v1472, 1
      %v1474 = vmin.f32 %v1472, %v1473
      %v1475 = vmin.f32 %v1314, %v1322
      %v1476 = vmin.f32 %v1475, %v1330
      %v1477 = vrot.slane %v1476, 4
      %v1478 = vmin.f32 %v1476, %v1477
      %v1479 = vrot.slane %v1478, 2
      %v1480 = vmin.f32 %v1478, %v1479
      %v1481 = vrot.slane %v1480, 1
      %v1482 = vmin.f32 %v1480, %v1481
      %v1483 = vmin.f32 %v1315, %v1323
      %v1484 = vmin.f32 %v1483, %v1331
      %v1485 = vrot.slane %v1484, 4
      %v1486 = vmin.f32 %v1484, %v1485
      %v1487 = vrot.slane %v1486, 2
      %v1488 = vmin.f32 %v1486, %v1487
      %v1489 = vrot.slane %v1488, 1
      %v1490 = vmin.f32 %v1488, %v1489
      %v1491 = vmin.f32 %v1316, %v1324
      %v1492 = vmin.f32 %v1491, %v1332
      %v1493 = vrot.slane %v1492, 4
      %v1494 = vmin.f32 %v1492, %v1493
      %v1495 = vrot.slane %v1494, 2
      %v1496 = vmin.f32 %v1494, %v1495
      %v1497 = vrot.slane %v1496, 1
      %v1498 = vmin.f32 %v1496, %v1497
      %v1499 = vmin.f32 %v1317, %v1325
      %v1500 = vmin.f32 %v1499, %v1333
      %v1501 = vrot.slane %v1500, 4
      %v1502 = vmin.f32 %v1500, %v1501
      %v1503 = vrot.slane %v1502, 2
      %v1504 = vmin.f32 %v1502, %v1503
      %v1505 = vrot.slane %v1504, 1
      %v1506 = vmin.f32 %v1504, %v1505
      %v1507 = vmin.f32 %v1318, %v1326
      %v1508 = vmin.f32 %v1507, %v1334
      %v1509 = vrot.slane %v1508, 4
      %v1510 = vmin.f32 %v1508, %v1509
      %v1511 = vrot.slane %v1510, 2
      %v1512 = vmin.f32 %v1510, %v1511
      %v1513 = vrot.slane %v1512, 1
      %v1514 = vmin.f32 %v1512, %v1513
      %v1515 = vmin.f32 %v1319, %v1327
      %v1516 = vmin.f32 %v1515, %v1335
      %v1517 = vrot.slane %v1516, 4
      %v1518 = vmin.f32 %v1516, %v1517
      %v1519 = vrot.slane %v1518, 2
      %v1520 = vmin.f32 %v1518, %v1519
      %v1521 = vrot.slane %v1520, 1
      %v1522 = vmin.f32 %v1520, %v1521
      %v1531 = vcombine.low %v1466, %v1474
      %v1532 = vcombine.low %v1482, %v1490
      %v1533 = vcombine.low %v1498, %v1506
      %v1534 = vcombine.low %v1514, %v1522
      %v1536 = vunpack.c.l.s4 1966171168
      %v1537 = vunpack.c.0.s8 %v1536
      %v1538 = vlaneseq
      %v1539 = vshrl.u32 %v1538, 7
      %v1540 = vsub.s32 %v1537, %v1539
      %v1541 = vrot.slane %v1531, %v1540
      %v1543 = vunpack.c.l.s4 1966171168
      %v1544 = vunpack.c.0.s8 %v1543
      %v1545 = vlaneseq
      %v1546 = vshrl.u32 %v1545, 7
      %v1547 = vsub.s32 %v1544, %v1546
      %v1548 = vrot.slane %v1532, %v1547
      %v1550 = vunpack.c.l.s4 1966171168
      %v1551 = vunpack.c.0.s8 %v1550
      %v1552 = vlaneseq
      %v1553 = vshrl.u32 %v1552, 7
      %v1554 = vsub.s32 %v1551, %v1553
      %v1555 = vrot.slane %v1533, %v1554
      %v1557 = vunpack.c.l.s4 1966171168
      %v1558 = vunpack.c.0.s8 %v1557
      %v1559 = vlaneseq
      %v1560 = vshrl.u32 %v1559, 7
      %v1561 = vsub.s32 %v1558, %v1560
      %v1562 = vrot.slane %v1534, %v1561
      %v1563 = vcombine.low %v1541, %v1548
      %v1564 = vcombine.low %v1555, %v1562
      %v1566 = vunpack.c.l.s4 1966171168
      %v1567 = vunpack.c.0.s8 %v1566
      %v1568 = vlaneseq
      %v1569 = vshrl.u32 %v1568, 7
      %v1570 = vsub.s32 %v1567, %v1569
      %v1571 = vrot.slane %v1563, %v1570
      %v1573 = vunpack.c.l.s4 1966171168
      %v1574 = vunpack.c.0.s8 %v1573
      %v1575 = vlaneseq
      %v1576 = vshrl.u32 %v1575, 7
      %v1577 = vsub.s32 %v1574, %v1576
      %v1578 = vrot.slane %v1564, %v1577
      %v1579 = vcombine.low %v1571, %v1578
      %1581 = vst [vmem:[%s354] sm:$0xff] %v1579
      %s1582 = sadd.s32 %s23, %s24
      %p1583 = scmp.lt.s32.totalorder %s1582, 1
      %s1584 = scalar_select %p1583, %s1582, 1
      %s1585 = smul.addr %s1584, 8
      %s1586 = scalar_lea.vmem %s4, %s1585
      %s1587 = sadd.s32 %s23, %s24
      %p1588 = scmp.lt.s32.totalorder %s1587, 1
      %s1589 = scalar_select %p1588, %s1587, 1
      %s1590 = smul.addr %s1589, 8
      %s1591 = scalar_lea.vmem %s5, %s1590
      %s1592 = sadd.s32 %s23, %s24
      %p1593 = scmp.lt.s32.totalorder %s1592, 1
      %s1594 = scalar_select %p1593, %s1592, 1
      %s1595 = smul.addr %s1594, 8
      %s1596 = scalar_lea.vmem %s6, %s1595
      %s1597 = sadd.s32 %s23, %s24
      %p1598 = scmp.lt.s32.totalorder %s1597, 1
      %s1599 = scalar_select %p1598, %s1597, 1
      %s1600 = smul.addr %s1599, 8
      %s1601 = scalar_lea.vmem %s7, %s1600
      // Predicated region
      $region37: #{pointnetfeat_forward.5} parent=35 // pred_check
        %p1602 = pneg %p142
      $region38: #{pointnetfeat_forward.5} parent=35 // pred_check_branch
        %1604 = sbr.rel (%p1602) target = $region40
      $region39: #{pointnetfeat_forward.5} parent=35 // pred_region
        %s1605 = sadd.s32 %s23, %s24
      $region40: #{pointnetfeat_forward.5} parent=35 // pred_fallthru
        _
      // Predicated region
      $region41: #{pointnetfeat_forward.5} parent=35 // pred_check
        %p1606 = pneg %p170
      $region42: #{pointnetfeat_forward.5} parent=35 // pred_check_branch
        %1608 = sbr.rel (%p1606) target = $region44
      $region43: #{pointnetfeat_forward.5} parent=35 // pred_region
        %s1609 = sadd.s32 %s23, %s24
      $region44: #{pointnetfeat_forward.5} parent=35 // pred_fallthru
        _
      // Predicated region
      $region45: #{pointnetfeat_forward.5} parent=35 // pred_check
        %p1610 = pneg %p198
      $region46: #{pointnetfeat_forward.5} parent=35 // pred_check_branch
        %1612 = sbr.rel (%p1610) target = $region48
      $region47: #{pointnetfeat_forward.5} parent=35 // pred_region
        %s1613 = sadd.s32 %s23, %s24
      $region48: #{pointnetfeat_forward.5} parent=35 // pred_fallthru
        _
      // Predicated region
      $region49: #{pointnetfeat_forward.5} parent=35 // pred_check
        %p1614 = pneg %p226
      $region50: #{pointnetfeat_forward.5} parent=35 // pred_check_branch
        %1616 = sbr.rel (%p1614) target = $region52
      $region51: #{pointnetfeat_forward.5} parent=35 // pred_region
        %s1617 = sadd.s32 %s23, %s24
      $region52: #{pointnetfeat_forward.5} parent=35 // pred_fallthru
        _
    $region36: #{pointnetfeat_forward.5} parent=5 // pred_fallthru
      _
    %p1618 = scmp.le.s32.totalorder 2, %s14
    // Predicated region
    $region53: #{pointnetfeat_forward.5} parent=5 // pred_check
      %p1619 = pneg %p1618
    $region54: #{pointnetfeat_forward.5} parent=5 // pred_check_branch
      %1621 = sbr.rel (%p1619) target = $region56
    $region55: #{pointnetfeat_forward.5} parent=5 // pred_region
      %s1622 = ssub.s32 %s14, 2
      // Predicated region
      $region57: #{pointnetfeat_forward.5} parent=55 // pred_check
        %p1623 = pneg %p148
      $region58: #{pointnetfeat_forward.5} parent=55 // pred_check_branch
        %1625 = sbr.rel (%p1623) target = $region60
      $region59: #{pointnetfeat_forward.5} parent=55 // pred_region
        %s1626 = sadd.s32 %s25, %s26
        %p1627 = scmp.lt.s32.totalorder %s1626, 1
        %s1628 = scalar_select %p1627, %s1626, 1
        %s1629 = smul.addr %s1628, 8
        %s1630 = scalar_lea.vmem %s4, %s1629
      $region60: #{pointnetfeat_forward.5} parent=55 // pred_fallthru
        _
      // Predicated region
      $region61: #{pointnetfeat_forward.5} parent=55 // pred_check
        %p1631 = pneg %p176
      $region62: #{pointnetfeat_forward.5} parent=55 // pred_check_branch
        %1633 = sbr.rel (%p1631) target = $region64
      $region63: #{pointnetfeat_forward.5} parent=55 // pred_region
        %s1634 = sadd.s32 %s25, %s26
        %p1635 = scmp.lt.s32.totalorder %s1634, 1
        %s1636 = scalar_select %p1635, %s1634, 1
        %s1637 = smul.addr %s1636, 8
        %s1638 = scalar_lea.vmem %s5, %s1637
      $region64: #{pointnetfeat_forward.5} parent=55 // pred_fallthru
        _
      // Predicated region
      $region65: #{pointnetfeat_forward.5} parent=55 // pred_check
        %p1639 = pneg %p204
      $region66: #{pointnetfeat_forward.5} parent=55 // pred_check_branch
        %1641 = sbr.rel (%p1639) target = $region68
      $region67: #{pointnetfeat_forward.5} parent=55 // pred_region
        %s1642 = sadd.s32 %s25, %s26
        %p1643 = scmp.lt.s32.totalorder %s1642, 1
        %s1644 = scalar_select %p1643, %s1642, 1
        %s1645 = smul.addr %s1644, 8
        %s1646 = scalar_lea.vmem %s6, %s1645
      $region68: #{pointnetfeat_forward.5} parent=55 // pred_fallthru
        _
      // Predicated region
      $region69: #{pointnetfeat_forward.5} parent=55 // pred_check
        %p1647 = pneg %p232
      $region70: #{pointnetfeat_forward.5} parent=55 // pred_check_branch
        %1649 = sbr.rel (%p1647) target = $region72
      $region71: #{pointnetfeat_forward.5} parent=55 // pred_region
        %s1650 = sadd.s32 %s25, %s26
        %p1651 = scmp.lt.s32.totalorder %s1650, 1
        %s1652 = scalar_select %p1651, %s1650, 1
        %s1653 = smul.addr %s1652, 8
        %s1654 = scalar_lea.vmem %s7, %s1653
      $region72: #{pointnetfeat_forward.5} parent=55 // pred_fallthru
        _
    $region56: #{pointnetfeat_forward.5} parent=5 // pred_fallthru
      _
  $region6: #{pointnetfeat_forward.5} parent=0 // loop_footer
    %s18 = sadd.s32 1, %s14
  $region7: #{pointnetfeat_forward.5} parent=0 // loop_footer_branch
    %13 = sbr.rel target = $region3
  $region8: #{pointnetfeat_forward.5} parent=0 // loop_exit
    _

</llo_original>
